<compile_context>
chip_gen: v5e
topology: v5e:2x2
jax: 0.10.0
libtpu: 0.0.40
codegen_flags: <defaults>
</compile_context>

<pallas_src>
from functools import partial

import jax
import jax.numpy as jnp
from jax import lax
from jax.experimental import pallas as pl
from jax.experimental.pallas import tpu as pltpu

# ---- hyperparameters (stand-ins for the argparse values in Train.py) ----
HYP_C = 0.1        # hyp_c
CLIP_R = 1.0       # clip_r
BALLDIM = 32       # balldims
N_CLASSES = 2

# small stand-in backbone config
C_IN, C_OUT, KSIZE, STRIDE, PAD = 4, 8, 3, 2, 1

VMEM_LIMIT_BYTES = 32 * 1024 * 1024   # safe on v5e/v6e (128 MiB) and v7x (64 MiB)
MIN_NORM = 1e-15                      # hyptorch clamp_min
BALL_EPS_F32 = 4e-3                   # hyptorch project() eps for float32


def _round_up(x, m):
    return ((x + m - 1) // m) * m


# ----------------------------------------------------------------------------
# Backbone conv (patch matmul + bias + ReLU), M-tiled Pallas matmul
# ----------------------------------------------------------------------------
def _conv_mm_kernel(p_ref, w_ref, b_ref, o_ref):
    acc = jnp.dot(p_ref[...], w_ref[...], preferred_element_type=jnp.float32)
    o_ref[...] = jnp.maximum(acc + b_ref[...], 0.0)


def backbone(x, wconv, bconv, *, tile_m=128):
    """Stand-in for the resnet18 feature extractor; returns flattened (B, C*H*W)."""
    B, C, H, W = x.shape
    # fused im2col via XLA (no materialized 9x patches tensor through a python loop)
    patches = lax.conv_general_dilated_patches(
        x, filter_shape=(KSIZE, KSIZE), window_strides=(STRIDE, STRIDE),
        padding=((PAD, PAD), (PAD, PAD)),
        dimension_numbers=("NCHW", "OIHW", "NCHW"))          # (B, C*k*k, Ho, Wo)
    _, CKK, Ho, Wo = patches.shape
    pm = patches.transpose(0, 2, 3, 1).reshape(B * Ho * Wo, CKK)
    M = pm.shape[0]

    if M >= tile_m:
        M_pad = _round_up(M, tile_m)
    else:
        tile_m = _round_up(M, 8)
        M_pad = tile_m
    nm = M_pad // tile_m

    pm = jnp.pad(pm, ((0, M_pad - M), (0, 0))).astype(jnp.bfloat16)
    w2 = wconv.reshape(wconv.shape[0], -1).T.astype(jnp.bfloat16)   # (C*k*k, Cout)
    b2 = bconv.reshape(1, -1).astype(jnp.float32)
    N = w2.shape[1]

    out = pl.pallas_call(
        _conv_mm_kernel,
        out_shape=jax.ShapeDtypeStruct((M_pad, N), jnp.float32),
        grid=(nm,),
        in_specs=[pl.BlockSpec((tile_m, CKK), lambda m: (m, 0)),
                  pl.BlockSpec((CKK, N), lambda m: (0, 0)),
                  pl.BlockSpec((1, N), lambda m: (0, 0))],
        out_specs=pl.BlockSpec((tile_m, N), lambda m: (m, 0)),
        compiler_params=pltpu.CompilerParams(
            dimension_semantics=("parallel",),
            vmem_limit_bytes=VMEM_LIMIT_BYTES),
    )(pm, w2, b2)

    feat = out[:M].reshape(B, Ho, Wo, N).transpose(0, 3, 1, 2)       # NCHW
    return feat.reshape(B, -1)                                       # torch.flatten(f, 1)


# ----------------------------------------------------------------------------
# Siamese head: |x1-x2| -> Linear -> ToPoincare -> HyperbolicMLR -> log_softmax
# ----------------------------------------------------------------------------
def _siamese_head_kernel(x1_ref, x2_ref, wfc_ref, bfc_ref, a_ref, p_ref,
                         xout_ref, logp_ref, y_acc, *, c, clip_r, n_classes):
    f = pl.program_id(1)

    @pl.when(f == 0)
    def _():
        y_acc[...] = jnp.zeros_like(y_acc)

    # ----- abs diff + fully-connected (F-tiled, f32 accumulation) -----
    d = jnp.abs(x1_ref[...] - x2_ref[...])                        # bf16
    y_acc[...] += jnp.dot(d, wfc_ref[...], preferred_element_type=jnp.float32)

    @pl.when(f == pl.num_programs(1) - 1)
    def _():
        sqrt_c = c ** 0.5
        y = y_acc[...] + bfc_ref[...]                             # (B, Dp)

        # ----- ToPoincare: clip_r feature clipping -----
        y_norm = jnp.sqrt(jnp.sum(y * y, axis=-1, keepdims=True)) + 1e-5
        fac = jnp.minimum(jnp.ones_like(y_norm),
                          clip_r * pl.reciprocal(y_norm, approx=True))
        y = y * fac
        # expmap0
        u_norm = jnp.maximum(jnp.sqrt(jnp.sum(y * y, axis=-1, keepdims=True)), MIN_NORM)
        gamma = jnp.tanh(sqrt_c * u_norm) * y * pl.reciprocal(sqrt_c * u_norm, approx=True)
        # project
        g_norm = jnp.maximum(jnp.sqrt(jnp.sum(gamma * gamma, axis=-1, keepdims=True)),
                             MIN_NORM)
        maxnorm = (1.0 - BALL_EPS_F32) / sqrt_c
        xp = jnp.where(g_norm > maxnorm,
                       gamma * (maxnorm * pl.reciprocal(g_norm, approx=True)),
                       gamma)                                     # (B, Dp)
        xout_ref[...] = xp

        # ----- HyperbolicMLR (class constants computed once per batch tile) -----
        P = p_ref[...]                                            # (K, Dp)
        A = a_ref[...]                                            # (K, Dp)
        p_norm = jnp.maximum(jnp.sqrt(jnp.sum(P * P, axis=-1, keepdims=True)), MIN_NORM)
        Pp = jnp.tanh(sqrt_c * p_norm) * P * pl.reciprocal(sqrt_c * p_norm, approx=True)
        pp2 = jnp.sum(Pp * Pp, axis=-1, keepdims=True)            # (K, 1)
        conformal = 1.0 - c * pp2
        Ap = A * conformal                                        # (K, Dp)
        a_norm = jnp.maximum(jnp.sqrt(jnp.sum(Ap * Ap, axis=-1, keepdims=True)), MIN_NORM)
        lam = 2.0 * pl.reciprocal(conformal, approx=True)
        kcoef = lam * a_norm / sqrt_c                             # (K, 1)

        y2 = jnp.sum(xp * xp, axis=-1, keepdims=True)             # (B, 1)

        logits = []
        for kk in range(n_classes):
            mp = -Pp[kk:kk + 1, :]                                # (1, Dp)  = -p_k
            ak = Ap[kk:kk + 1, :]
            x2k = pp2[kk:kk + 1, :]
            ank = a_norm[kk:kk + 1, :]
            kck = kcoef[kk:kk + 1, :]
            # mobius addition (-p_k) (+)_c x
            xy = jnp.sum(mp * xp, axis=-1, keepdims=True)         # (B, 1)
            num = (1.0 + 2.0 * c * xy + c * y2) * mp + (1.0 - c * x2k) * xp
            den = 1.0 + 2.0 * c * xy + (c * c) * x2k * y2
            mob = num * pl.reciprocal(den + 1e-5, approx=True)    # (B, Dp)
            num2 = 2.0 * sqrt_c * jnp.sum(mob * ak, axis=-1, keepdims=True)
            den2 = ank * (1.0 - c * jnp.sum(mob * mob, axis=-1, keepdims=True))
            den2 = jnp.where(jnp.abs(den2) < 1e-10, 1e-10, den2)  # guard /0
            v = num2 * pl.reciprocal(den2, approx=True)
            # sign-stable asinh (no cancellation for negative v)
            abs_v = jnp.abs(v)
            asinh_v = jnp.where(v >= 0.0, 1.0, -1.0) * \
                jnp.log(abs_v + jnp.sqrt(abs_v * abs_v + 1.0))
            logits.append(kck * asinh_v)                          # (B, 1)

        # ----- log_softmax over the n_classes real columns -----
        m = logits[0]
        for l in logits[1:]:
            m = jnp.maximum(m, l)
        ssum = jnp.zeros_like(m)
        for l in logits:
            ssum = ssum + jnp.exp(l - m)
        lse = m + jnp.log(ssum)

        # lane-dense (B, 128) store; padded lanes are zero, sliced off outside
        col = jax.lax.broadcasted_iota(jnp.int32, logp_ref.shape, 1)
        out = jnp.zeros(logp_ref.shape, jnp.float32)
        for kk in range(n_classes):
            out = jnp.where(col == kk, logits[kk] - lse, out)
        logp_ref[...] = out


def siamese_head(x1, x2, wfc, bfc, a_vals, p_vals, *, c, clip_r,
                 tile_b=8, tile_f=256):
    B, F = x1.shape
    D = wfc.shape[1]
    K = a_vals.shape[0]

    DP = _round_up(max(D, 128), 128)          # lane-dense ball dim
    KP = _round_up(max(K, 128), 128)          # lane-dense logits buffer

    B_pad = _round_up(B, tile_b)
    if F >= tile_f:
        F_pad = _round_up(F, tile_f)
    else:
        tile_f = _round_up(F, 128)
        F_pad = tile_f
    nb = B_pad // tile_b
    nf = F_pad // tile_f

    # zero padding: padded rows/cols contribute 0 to every row-sum -> exact
    x1p = jnp.pad(x1, ((0, B_pad - B), (0, F_pad - F))).astype(jnp.bfloat16)
    x2p = jnp.pad(x2, ((0, B_pad - B), (0, F_pad - F))).astype(jnp.bfloat16)
    wfcp = jnp.pad(wfc, ((0, F_pad - F), (0, DP - D))).astype(jnp.bfloat16)
    bfcp = jnp.pad(bfc.reshape(1, -1), ((0, 0), (0, DP - D))).astype(jnp.float32)
    ap = jnp.pad(a_vals, ((0, 0), (0, DP - D))).astype(jnp.float32)
    pp = jnp.pad(p_vals, ((0, 0), (0, DP - D))).astype(jnp.float32)

    kern = partial(_siamese_head_kernel, c=c, clip_r=clip_r, n_classes=K)
    xout_p, logp_p = pl.pallas_call(
        kern,
        out_shape=(jax.ShapeDtypeStruct((B_pad, DP), jnp.float32),
                   jax.ShapeDtypeStruct((B_pad, KP), jnp.float32)),
        grid=(nb, nf),                        # reduction (F) axis last
        in_specs=[pl.BlockSpec((tile_b, tile_f), lambda b, f: (b, f)),
                  pl.BlockSpec((tile_b, tile_f), lambda b, f: (b, f)),
                  pl.BlockSpec((tile_f, DP), lambda b, f: (f, 0)),
                  pl.BlockSpec((1, DP), lambda b, f: (0, 0)),
                  pl.BlockSpec((K, DP), lambda b, f: (0, 0)),
                  pl.BlockSpec((K, DP), lambda b, f: (0, 0))],
        out_specs=(pl.BlockSpec((tile_b, DP), lambda b, f: (b, 0)),
                   pl.BlockSpec((tile_b, KP), lambda b, f: (b, 0))),
        scratch_shapes=[pltpu.VMEM((tile_b, DP), jnp.float32)],
        compiler_params=pltpu.CompilerParams(
            dimension_semantics=("parallel", "arbitrary"),
            vmem_limit_bytes=VMEM_LIMIT_BYTES),
    )(x1p, x2p, wfcp, bfcp, ap, pp)

    return xout_p[:B, :D], logp_p[:B, :K]


def siamese_forward(input1, input2, params):
    # fuse the two backbone passes: one conv pallas_call, weights DMA'd once
    B = input1.shape[0]
    feats = backbone(jnp.concatenate([input1, input2], axis=0),
                     params["wconv"], params["bconv"])
    x1, x2 = feats[:B], feats[B:]
    return siamese_head(x1, x2, params["wfc"], params["bfc"],
                        params["a_vals"], params["p_vals"],
                        c=HYP_C, clip_r=CLIP_R)


if __name__ == "__main__":
    key = jax.random.PRNGKey(0)
    ks = jax.random.split(key, 8)

    B, H, W = 2, 16, 16
    input1 = jax.random.normal(ks[0], (B, C_IN, H, W), jnp.float32)
    input2 = jax.random.normal(ks[1], (B, C_IN, H, W), jnp.float32)

    Ho = (H + 2 * PAD - KSIZE) // STRIDE + 1
    FLAT = C_OUT * Ho * Ho                     # analogue of 512*7*7 at small scale

    params = {
        "wconv": jax.random.normal(ks[2], (C_OUT, C_IN, KSIZE, KSIZE), jnp.float32) * 0.1,
        "bconv": jax.random.normal(ks[3], (C_OUT,), jnp.float32) * 0.1,
        "wfc": jax.random.normal(ks[4], (FLAT, BALLDIM), jnp.float32) * (1.0 / FLAT ** 0.5),
        "bfc": jax.random.normal(ks[5], (1, BALLDIM), jnp.float32) * 0.01,
        "a_vals": jax.random.normal(ks[6], (N_CLASSES, BALLDIM), jnp.float32) * 0.1,
        "p_vals": jax.random.normal(ks[7], (N_CLASSES, BALLDIM), jnp.float32) * 0.1,
    }

    fwd = jax.jit(siamese_forward)
    x_poincare, log_probs = fwd(input1, input2, params)
    jax.block_until_ready((x_poincare, log_probs))
    assert x_poincare.shape == (B, BALLDIM)
    assert log_probs.shape == (B, N_CLASSES)
    assert bool(jnp.all(jnp.isfinite(x_poincare))) and bool(jnp.all(jnp.isfinite(log_probs)))
    print("KERNEL_OK")
</pallas_src>

<mosaic_0001>
module attributes {stable_mosaic.version = 11 : i64} {
  func.func @_conv_mm_kernel(%arg0: i32, %arg1: memref<128x36xbf16, #tpu.memory_space<vmem>>, %arg2: memref<36x8xbf16, #tpu.memory_space<vmem>>, %arg3: memref<1x8xf32, #tpu.memory_space<vmem>>, %arg4: memref<128x8xf32, #tpu.memory_space<vmem>>) attributes {dimension_semantics = [#tpu.dimension_semantics<parallel>], iteration_bounds = array<i64: 2>, scalar_prefetch = 0 : i64, scratch_operands = 0 : i64, tpu.core_type = #tpu.core_type<tc>, window_params = [{transform_indices = @transform_0, window_bounds = array<i64: 128, 36>}, {pipeline_mode = #tpu.pipeline_mode<synchronous>, transform_indices = @transform_1, window_bounds = array<i64: 36, 8>}, {pipeline_mode = #tpu.pipeline_mode<synchronous>, transform_indices = @transform_2, window_bounds = array<i64: 1, 8>}, {transform_indices = @transform_3, window_bounds = array<i64: 128, 8>}]} {
    %c0 = arith.constant 0 : index
    %c0_0 = arith.constant 0 : index
    %0 = vector.load %arg1[%c0, %c0_0] : memref<128x36xbf16, #tpu.memory_space<vmem>>, vector<128x36xbf16>
    %c0_1 = arith.constant 0 : index
    %c0_2 = arith.constant 0 : index
    %1 = vector.load %arg2[%c0_1, %c0_2] : memref<36x8xbf16, #tpu.memory_space<vmem>>, vector<36x8xbf16>
    %cst = arith.constant dense<0.000000e+00> : vector<128x8xf32>
    %2 = tpu.matmul %0, %1, %cst {dimension_numbers = #tpu.dot_dimension_numbers<[1], [0], [0], [1], [0, 0, 1, 1], [], []>} : vector<128x36xbf16>, vector<36x8xbf16>, vector<128x8xf32> -> vector<128x8xf32>
    %c0_3 = arith.constant 0 : index
    %c0_4 = arith.constant 0 : index
    %3 = vector.load %arg3[%c0_3, %c0_4] : memref<1x8xf32, #tpu.memory_space<vmem>>, vector<1x8xf32>
    %4 = vector.broadcast %3 : vector<1x8xf32> to vector<128x8xf32>
    %5 = arith.addf %2, %4 : vector<128x8xf32>
    %cst_5 = arith.constant 0.000000e+00 : f32
    %6 = vector.broadcast %cst_5 : f32 to vector<128x8xf32>
    %7 = arith.maximumf %5, %6 : vector<128x8xf32>
    %c0_6 = arith.constant 0 : index
    %c0_7 = arith.constant 0 : index
    %8 = vector.load %arg4[%c0_6, %c0_7] : memref<128x8xf32, #tpu.memory_space<vmem>>, vector<128x8xf32>
    tpu.vector_store %arg4[%c0_6, %c0_7], %7 {strides = array<i32>} : memref<128x8xf32, #tpu.memory_space<vmem>>, vector<128x8xf32>,
    return
  }
  func.func @transform_0(%arg0: i32) -> (i32, i32) {
    %c0_i32 = arith.constant 0 : i32
    %c0_i32_0 = arith.constant 0 : i32
    return %arg0, %c0_i32 : i32, i32
  }
  func.func @transform_1(%arg0: i32) -> (i32, i32) {
    %c0_i32 = arith.constant 0 : i32
    %c0_i32_0 = arith.constant 0 : i32
    %c0_i32_1 = arith.constant 0 : i32
    return %c0_i32, %c0_i32_0 : i32, i32
  }
  func.func @transform_2(%arg0: i32) -> (i32, i32) {
    %c0_i32 = arith.constant 0 : i32
    %c0_i32_0 = arith.constant 0 : i32
    %c0_i32_1 = arith.constant 0 : i32
    return %c0_i32, %c0_i32_0 : i32, i32
  }
  func.func @transform_3(%arg0: i32) -> (i32, i32) {
    %c0_i32 = arith.constant 0 : i32
    %c0_i32_0 = arith.constant 0 : i32
    return %arg0, %c0_i32 : i32, i32
  }
}

module attributes {stable_mosaic.version = 11 : i64} {
  func.func @_siamese_head_kernel(%arg0: i32, %arg1: i32, %arg2: memref<8x256xbf16, #tpu.memory_space<vmem>>, %arg3: memref<8x256xbf16, #tpu.memory_space<vmem>>, %arg4: memref<256x128xbf16, #tpu.memory_space<vmem>>, %arg5: memref<1x128xf32, #tpu.memory_space<vmem>>, %arg6: memref<2x128xf32, #tpu.memory_space<vmem>>, %arg7: memref<2x128xf32, #tpu.memory_space<vmem>>, %arg8: memref<8x128xf32, #tpu.memory_space<vmem>>, %arg9: memref<8x128xf32, #tpu.memory_space<vmem>>, %arg10: memref<8x128xf32, #tpu.memory_space<vmem>>) attributes {dimension_semantics = [#tpu.dimension_semantics<parallel>, #tpu.dimension_semantics<arbitrary>], iteration_bounds = array<i64: 1, 2>, scalar_prefetch = 0 : i64, scratch_operands = 1 : i64, tpu.core_type = #tpu.core_type<tc>, window_params = [{transform_indices = @transform_0, window_bounds = array<i64: 8, 256>}, {transform_indices = @transform_1, window_bounds = array<i64: 8, 256>}, {transform_indices = @transform_2, window_bounds = array<i64: 256, 128>}, {pipeline_mode = #tpu.pipeline_mode<synchronous>, transform_indices = @transform_3, window_bounds = array<i64: 1, 128>}, {pipeline_mode = #tpu.pipeline_mode<synchronous>, transform_indices = @transform_4, window_bounds = array<i64: 2, 128>}, {pipeline_mode = #tpu.pipeline_mode<synchronous>, transform_indices = @transform_5, window_bounds = array<i64: 2, 128>}, {transform_indices = @transform_6, window_bounds = array<i64: 8, 128>}, {transform_indices = @transform_7, window_bounds = array<i64: 8, 128>}]} {
    %c0_i32 = arith.constant 0 : i32
    %0 = arith.cmpi eq, %arg1, %c0_i32 : i32
    %1 = arith.extui %0 : i1 to i32
    %c0_i32_0 = arith.constant 0 : i32
    %2 = arith.cmpi ne, %1, %c0_i32_0 : i32
    scf.if %2 {
      %cst_11 = arith.constant 0.000000e+00 : f32
      %15 = vector.broadcast %cst_11 : f32 to vector<8x128xf32>
      %c0_12 = arith.constant 0 : index
      %c0_13 = arith.constant 0 : index
      %16 = vector.load %arg10[%c0_12, %c0_13] : memref<8x128xf32, #tpu.memory_space<vmem>>, vector<8x128xf32>
      tpu.vector_store %arg10[%c0_12, %c0_13], %15 {strides = array<i32>} : memref<8x128xf32, #tpu.memory_space<vmem>>, vector<8x128xf32>,
    } else {
    }
    %c0 = arith.constant 0 : index
    %c0_1 = arith.constant 0 : index
    %3 = vector.load %arg2[%c0, %c0_1] : memref<8x256xbf16, #tpu.memory_space<vmem>>, vector<8x256xbf16>
    %c0_2 = arith.constant 0 : index
    %c0_3 = arith.constant 0 : index
    %4 = vector.load %arg3[%c0_2, %c0_3] : memref<8x256xbf16, #tpu.memory_space<vmem>>, vector<8x256xbf16>
    %5 = arith.subf %3, %4 : vector<8x256xbf16>
    %6 = math.absf %5 : vector<8x256xbf16>
    %c0_4 = arith.constant 0 : index
    %c0_5 = arith.constant 0 : index
    %7 = vector.load %arg10[%c0_4, %c0_5] : memref<8x128xf32, #tpu.memory_space<vmem>>, vector<8x128xf32>
    %c0_6 = arith.constant 0 : index
    %c0_7 = arith.constant 0 : index
    %8 = vector.load %arg4[%c0_6, %c0_7] : memref<256x128xbf16, #tpu.memory_space<vmem>>, vector<256x128xbf16>
    %cst = arith.constant dense<0.000000e+00> : vector<8x128xf32>
    %9 = tpu.matmul %6, %8, %cst {dimension_numbers = #tpu.dot_dimension_numbers<[1], [0], [0], [1], [0, 0, 1, 1], [], []>} : vector<8x256xbf16>, vector<256x128xbf16>, vector<8x128xf32> -> vector<8x128xf32>
    %10 = arith.addf %7, %9 : vector<8x128xf32>
    %c0_8 = arith.constant 0 : index
    %c0_9 = arith.constant 0 : index
    %11 = vector.load %arg10[%c0_8, %c0_9] : memref<8x128xf32, #tpu.memory_space<vmem>>, vector<8x128xf32>
    tpu.vector_store %arg10[%c0_8, %c0_9], %10 {strides = array<i32>} : memref<8x128xf32, #tpu.memory_space<vmem>>, vector<8x128xf32>,
    %c1_i32 = arith.constant 1 : i32
    %12 = arith.cmpi eq, %arg1, %c1_i32 : i32
    %13 = arith.extui %12 : i1 to i32
    %c0_i32_10 = arith.constant 0 : i32
    %14 = arith.cmpi ne, %13, %c0_i32_10 : i32
    scf.if %14 {
      %c0_11 = arith.constant 0 : index
      %c0_12 = arith.constant 0 : index
      %15 = vector.load %arg10[%c0_11, %c0_12] : memref<8x128xf32, #tpu.memory_space<vmem>>, vector<8x128xf32>
      %c0_13 = arith.constant 0 : index
      %c0_14 = arith.constant 0 : index
      %16 = vector.load %arg5[%c0_13, %c0_14] : memref<1x128xf32, #tpu.memory_space<vmem>>, vector<1x128xf32>
      %17 = vector.broadcast %16 : vector<1x128xf32> to vector<8x128xf32>
      %18 = arith.addf %15, %17 : vector<8x128xf32>
      %19 = arith.mulf %18, %18 : vector<8x128xf32>
      %cst_15 = arith.constant dense<0.000000e+00> : vector<8xf32>
      %20 = vector.multi_reduction <add>, %19, %cst_15 [1] : vector<8x128xf32> to vector<8xf32>
      %21 = vector.shape_cast %20 : vector<8xf32> to vector<8x1xf32>
      %22 = math.sqrt %21 : vector<8x1xf32>
      %cst_16 = arith.constant 9.99999974E-6 : f32
      %23 = vector.broadcast %cst_16 : f32 to vector<8x1xf32>
      %24 = arith.addf %22, %23 : vector<8x1xf32>
      %cst_17 = arith.constant 1.000000e+00 : f32
      %25 = vector.broadcast %cst_17 : f32 to vector<8x1xf32>
      %26 = tpu.reciprocal %24 {approx = true} : vector<8x1xf32> -> vector<8x1xf32>
      %cst_18 = arith.constant 1.000000e+00 : f32
      %27 = vector.broadcast %cst_18 : f32 to vector<8x1xf32>
      %28 = arith.mulf %27, %26 : vector<8x1xf32>
      %29 = arith.minimumf %25, %28 : vector<8x1xf32>
      %30 = vector.broadcast %29 : vector<8x1xf32> to vector<8x128xf32>
      %31 = arith.mulf %18, %30 : vector<8x128xf32>
      %32 = arith.mulf %31, %31 : vector<8x128xf32>
      %cst_19 = arith.constant dense<0.000000e+00> : vector<8xf32>
      %33 = vector.multi_reduction <add>, %32, %cst_19 [1] : vector<8x128xf32> to vector<8xf32>
      %34 = vector.shape_cast %33 : vector<8xf32> to vector<8x1xf32>
      %35 = math.sqrt %34 : vector<8x1xf32>
      %cst_20 = arith.constant 1.000000e-15 : f32
      %36 = vector.broadcast %cst_20 : f32 to vector<8x1xf32>
      %37 = arith.maximumf %35, %36 : vector<8x1xf32>
      %cst_21 = arith.constant 0.316227764 : f32
      %38 = vector.broadcast %cst_21 : f32 to vector<8x1xf32>
      %39 = arith.mulf %38, %37 : vector<8x1xf32>
      %40 = math.tanh %39 : vector<8x1xf32>
      %41 = vector.broadcast %40 : vector<8x1xf32> to vector<8x128xf32>
      %42 = arith.mulf %41, %31 : vector<8x128xf32>
      %cst_22 = arith.constant 0.316227764 : f32
      %43 = vector.broadcast %cst_22 : f32 to vector<8x1xf32>
      %44 = arith.mulf %43, %37 : vector<8x1xf32>
      %45 = tpu.reciprocal %44 {approx = true} : vector<8x1xf32> -> vector<8x1xf32>
      %46 = vector.broadcast %45 : vector<8x1xf32> to vector<8x128xf32>
      %47 = arith.mulf %42, %46 : vector<8x128xf32>
      %48 = arith.mulf %47, %47 : vector<8x128xf32>
      %cst_23 = arith.constant dense<0.000000e+00> : vector<8xf32>
      %49 = vector.multi_reduction <add>, %48, %cst_23 [1] : vector<8x128xf32> to vector<8xf32>
      %50 = vector.shape_cast %49 : vector<8xf32> to vector<8x1xf32>
      %51 = math.sqrt %50 : vector<8x1xf32>
      %cst_24 = arith.constant 1.000000e-15 : f32
      %52 = vector.broadcast %cst_24 : f32 to vector<8x1xf32>
      %53 = arith.maximumf %51, %52 : vector<8x1xf32>
      %cst_25 = arith.constant 3.14962864 : f32
      %54 = vector.broadcast %cst_25 : f32 to vector<8x1xf32>
      %55 = arith.cmpf ogt, %53, %54 : vector<8x1xf32>
      %56 = tpu.reciprocal %53 {approx = true} : vector<8x1xf32> -> vector<8x1xf32>
      %cst_26 = arith.constant 3.14962864 : f32
      %57 = vector.broadcast %cst_26 : f32 to vector<8x1xf32>
      %58 = arith.mulf %57, %56 : vector<8x1xf32>
      %59 = vector.broadcast %58 : vector<8x1xf32> to vector<8x128xf32>
      %60 = arith.mulf %47, %59 : vector<8x128xf32>
      %61 = vector.shape_cast %55 : vector<8x1xi1> to vector<8x1xi1>
      %62 = vector.broadcast %61 : vector<8x1xi1> to vector<8x128xi1>
      %63 = arith.select %62, %60, %47 : vector<8x128xi1>, vector<8x128xf32>
      %c0_27 = arith.constant 0 : index
      %c0_28 = arith.constant 0 : index
      %64 = vector.load %arg8[%c0_27, %c0_28] : memref<8x128xf32, #tpu.memory_space<vmem>>, vector<8x128xf32>
      tpu.vector_store %arg8[%c0_27, %c0_28], %63 {strides = array<i32>} : memref<8x128xf32, #tpu.memory_space<vmem>>, vector<8x128xf32>,
      %c0_29 = arith.constant 0 : index
      %c0_30 = arith.constant 0 : index
      %65 = vector.load %arg7[%c0_29, %c0_30] : memref<2x128xf32, #tpu.memory_space<vmem>>, vector<2x128xf32>
      %c0_31 = arith.constant 0 : index
      %c0_32 = arith.constant 0 : index
      %66 = vector.load %arg6[%c0_31, %c0_32] : memref<2x128xf32, #tpu.memory_space<vmem>>, vector<2x128xf32>
      %67 = arith.mulf %65, %65 : vector<2x128xf32>
      %cst_33 = arith.constant dense<0.000000e+00> : vector<2xf32>
      %68 = vector.multi_reduction <add>, %67, %cst_33 [1] : vector<2x128xf32> to vector<2xf32>
      %69 = vector.shape_cast %68 : vector<2xf32> to vector<2x1xf32>
      %70 = math.sqrt %69 : vector<2x1xf32>
      %cst_34 = arith.constant 1.000000e-15 : f32
      %71 = vector.broadcast %cst_34 : f32 to vector<2x1xf32>
      %72 = arith.maximumf %70, %71 : vector<2x1xf32>
      %cst_35 = arith.constant 0.316227764 : f32
      %73 = vector.broadcast %cst_35 : f32 to vector<2x1xf32>
      %74 = arith.mulf %73, %72 : vector<2x1xf32>
      %75 = math.tanh %74 : vector<2x1xf32>
      %76 = vector.broadcast %75 : vector<2x1xf32> to vector<2x128xf32>
      %77 = arith.mulf %76, %65 : vector<2x128xf32>
      %cst_36 = arith.constant 0.316227764 : f32
      %78 = vector.broadcast %cst_36 : f32 to vector<2x1xf32>
      %79 = arith.mulf %78, %72 : vector<2x1xf32>
      %80 = tpu.reciprocal %79 {approx = true} : vector<2x1xf32> -> vector<2x1xf32>
      %81 = vector.broadcast %80 : vector<2x1xf32> to vector<2x128xf32>
      %82 = arith.mulf %77, %81 : vector<2x128xf32>
      %83 = arith.mulf %82, %82 : vector<2x128xf32>
      %cst_37 = arith.constant dense<0.000000e+00> : vector<2xf32>
      %84 = vector.multi_reduction <add>, %83, %cst_37 [1] : vector<2x128xf32> to vector<2xf32>
      %85 = vector.shape_cast %84 : vector<2xf32> to vector<2x1xf32>
      %cst_38 = arith.constant 1.000000e-01 : f32
      %86 = vector.broadcast %cst_38 : f32 to vector<2x1xf32>
      %87 = arith.mulf %86, %85 : vector<2x1xf32>
      %cst_39 = arith.constant 1.000000e+00 : f32
      %88 = vector.broadcast %cst_39 : f32 to vector<2x1xf32>
      %89 = arith.subf %88, %87 : vector<2x1xf32>
      %90 = vector.broadcast %89 : vector<2x1xf32> to vector<2x128xf32>
      %91 = arith.mulf %66, %90 : vector<2x128xf32>
      %92 = arith.mulf %91, %91 : vector<2x128xf32>
      %cst_40 = arith.constant dense<0.000000e+00> : vector<2xf32>
      %93 = vector.multi_reduction <add>, %92, %cst_40 [1] : vector<2x128xf32> to vector<2xf32>
      %94 = vector.shape_cast %93 : vector<2xf32> to vector<2x1xf32>
      %95 = math.sqrt %94 : vector<2x1xf32>
      %cst_41 = arith.constant 1.000000e-15 : f32
      %96 = vector.broadcast %cst_41 : f32 to vector<2x1xf32>
      %97 = arith.maximumf %95, %96 : vector<2x1xf32>
      %98 = tpu.reciprocal %89 {approx = true} : vector<2x1xf32> -> vector<2x1xf32>
      %cst_42 = arith.constant 2.000000e+00 : f32
      %99 = vector.broadcast %cst_42 : f32 to vector<2x1xf32>
      %100 = arith.mulf %99, %98 : vector<2x1xf32>
      %101 = arith.mulf %100, %97 : vector<2x1xf32>
      %cst_43 = arith.constant 0.316227764 : f32
      %102 = vector.broadcast %cst_43 : f32 to vector<2x1xf32>
      %103 = arith.divf %101, %102 : vector<2x1xf32>
      %104 = arith.mulf %63, %63 : vector<8x128xf32>
      %cst_44 = arith.constant dense<0.000000e+00> : vector<8xf32>
      %105 = vector.multi_reduction <add>, %104, %cst_44 [1] : vector<8x128xf32> to vector<8xf32>
      %106 = vector.shape_cast %105 : vector<8xf32> to vector<8x1xf32>
      %107 = vector.extract_strided_slice %82 {offsets = [0, 0], sizes = [1, 128], strides = [1, 1]} : vector<2x128xf32> to vector<1x128xf32>
      %cst_45 = arith.constant 0.000000e+00 : f32
      %108 = vector.broadcast %cst_45 : f32 to vector<1x128xf32>
      %109 = arith.subf %108, %107 : vector<1x128xf32>
      %110 = vector.extract_strided_slice %91 {offsets = [0, 0], sizes = [1, 128], strides = [1, 1]} : vector<2x128xf32> to vector<1x128xf32>
      %111 = vector.extract_strided_slice %85 {offsets = [0, 0], sizes = [1, 1], strides = [1, 1]} : vector<2x1xf32> to vector<1x1xf32>
      %112 = vector.extract_strided_slice %97 {offsets = [0, 0], sizes = [1, 1], strides = [1, 1]} : vector<2x1xf32> to vector<1x1xf32>
      %113 = vector.extract_strided_slice %103 {offsets = [0, 0], sizes = [1, 1], strides = [1, 1]} : vector<2x1xf32> to vector<1x1xf32>
      %114 = vector.broadcast %109 : vector<1x128xf32> to vector<8x128xf32>
      %115 = arith.mulf %114, %63 : vector<8x128xf32>
      %cst_46 = arith.constant dense<0.000000e+00> : vector<8xf32>
      %116 = vector.multi_reduction <add>, %115, %cst_46 [1] : vector<8x128xf32> to vector<8xf32>
      %117 = vector.shape_cast %116 : vector<8xf32> to vector<8x1xf32>
      %cst_47 = arith.constant 2.000000e-01 : f32
      %118 = vector.broadcast %cst_47 : f32 to vector<8x1xf32>
      %119 = arith.mulf %118, %117 : vector<8x1xf32>
      %cst_48 = arith.constant 1.000000e+00 : f32
      %120 = vector.broadcast %cst_48 : f32 to vector<8x1xf32>
      %121 = arith.addf %120, %119 : vector<8x1xf32>
      %cst_49 = arith.constant 1.000000e-01 : f32
      %122 = vector.broadcast %cst_49 : f32 to vector<8x1xf32>
      %123 = arith.mulf %122, %106 : vector<8x1xf32>
      %124 = arith.addf %121, %123 : vector<8x1xf32>
      %125 = vector.broadcast %124 : vector<8x1xf32> to vector<8x128xf32>
      %126 = vector.broadcast %109 : vector<1x128xf32> to vector<8x128xf32>
      %127 = arith.mulf %125, %126 : vector<8x128xf32>
      %cst_50 = arith.constant 1.000000e-01 : f32
      %128 = vector.broadcast %cst_50 : f32 to vector<1x1xf32>
      %129 = arith.mulf %128, %111 : vector<1x1xf32>
      %cst_51 = arith.constant 1.000000e+00 : f32
      %130 = vector.broadcast %cst_51 : f32 to vector<1x1xf32>
      %131 = arith.subf %130, %129 : vector<1x1xf32>
      %132 = vector.broadcast %131 : vector<1x1xf32> to vector<8x128xf32>
      %133 = arith.mulf %132, %63 : vector<8x128xf32>
      %134 = arith.addf %127, %133 : vector<8x128xf32>
      %cst_52 = arith.constant 2.000000e-01 : f32
      %135 = vector.broadcast %cst_52 : f32 to vector<8x1xf32>
      %136 = arith.mulf %135, %117 : vector<8x1xf32>
      %cst_53 = arith.constant 1.000000e+00 : f32
      %137 = vector.broadcast %cst_53 : f32 to vector<8x1xf32>
      %138 = arith.addf %137, %136 : vector<8x1xf32>
      %cst_54 = arith.constant 0.00999999977 : f32
      %139 = vector.broadcast %cst_54 : f32 to vector<1x1xf32>
      %140 = arith.mulf %139, %111 : vector<1x1xf32>
      %141 = vector.broadcast %140 : vector<1x1xf32> to vector<8x1xf32>
      %142 = arith.mulf %141, %106 : vector<8x1xf32>
      %143 = arith.addf %138, %142 : vector<8x1xf32>
      %cst_55 = arith.constant 9.99999974E-6 : f32
      %144 = vector.broadcast %cst_55 : f32 to vector<8x1xf32>
      %145 = arith.addf %143, %144 : vector<8x1xf32>
      %146 = tpu.reciprocal %145 {approx = true} : vector<8x1xf32> -> vector<8x1xf32>
      %147 = vector.broadcast %146 : vector<8x1xf32> to vector<8x128xf32>
      %148 = arith.mulf %134, %147 : vector<8x128xf32>
      %149 = vector.broadcast %110 : vector<1x128xf32> to vector<8x128xf32>
      %150 = arith.mulf %148, %149 : vector<8x128xf32>
      %cst_56 = arith.constant dense<0.000000e+00> : vector<8xf32>
      %151 = vector.multi_reduction <add>, %150, %cst_56 [1] : vector<8x128xf32> to vector<8xf32>
      %152 = vector.shape_cast %151 : vector<8xf32> to vector<8x1xf32>
      %cst_57 = arith.constant 0.632455527 : f32
      %153 = vector.broadcast %cst_57 : f32 to vector<8x1xf32>
      %154 = arith.mulf %153, %152 : vector<8x1xf32>
      %155 = arith.mulf %148, %148 : vector<8x128xf32>
      %cst_58 = arith.constant dense<0.000000e+00> : vector<8xf32>
      %156 = vector.multi_reduction <add>, %155, %cst_58 [1] : vector<8x128xf32> to vector<8xf32>
      %157 = vector.shape_cast %156 : vector<8xf32> to vector<8x1xf32>
      %cst_59 = arith.constant 1.000000e-01 : f32
      %158 = vector.broadcast %cst_59 : f32 to vector<8x1xf32>
      %159 = arith.mulf %158, %157 : vector<8x1xf32>
      %cst_60 = arith.constant 1.000000e+00 : f32
      %160 = vector.broadcast %cst_60 : f32 to vector<8x1xf32>
      %161 = arith.subf %160, %159 : vector<8x1xf32>
      %162 = vector.broadcast %112 : vector<1x1xf32> to vector<8x1xf32>
      %163 = arith.mulf %162, %161 : vector<8x1xf32>
      %164 = math.absf %163 : vector<8x1xf32>
      %cst_61 = arith.constant 1.000000e-10 : f32
      %165 = vector.broadcast %cst_61 : f32 to vector<8x1xf32>
      %166 = arith.cmpf olt, %164, %165 : vector<8x1xf32>
      %cst_62 = arith.constant 1.000000e-10 : f32
      %167 = vector.broadcast %cst_62 : f32 to vector<8x1xf32>
      %168 = arith.select %166, %167, %163 : vector<8x1xi1>, vector<8x1xf32>
      %169 = tpu.reciprocal %168 {approx = true} : vector<8x1xf32> -> vector<8x1xf32>
      %170 = arith.mulf %154, %169 : vector<8x1xf32>
      %171 = math.absf %170 : vector<8x1xf32>
      %cst_63 = arith.constant 0.000000e+00 : f32
      %172 = vector.broadcast %cst_63 : f32 to vector<8x1xf32>
      %173 = arith.cmpf oge, %170, %172 : vector<8x1xf32>
      %cst_64 = arith.constant 1.000000e+00 : f32
      %cst_65 = arith.constant -1.000000e+00 : f32
      %174 = vector.broadcast %cst_64 : f32 to vector<8x1xf32>
      %175 = vector.broadcast %cst_65 : f32 to vector<8x1xf32>
      %176 = arith.select %173, %174, %175 : vector<8x1xi1>, vector<8x1xf32>
      %177 = arith.mulf %171, %171 : vector<8x1xf32>
      %cst_66 = arith.constant 1.000000e+00 : f32
      %178 = vector.broadcast %cst_66 : f32 to vector<8x1xf32>
      %179 = arith.addf %177, %178 : vector<8x1xf32>
      %180 = math.sqrt %179 : vector<8x1xf32>
      %181 = arith.addf %171, %180 : vector<8x1xf32>
      %182 = math.log %181 : vector<8x1xf32>
      %183 = arith.mulf %176, %182 : vector<8x1xf32>
      %184 = vector.broadcast %113 : vector<1x1xf32> to vector<8x1xf32>
      %185 = arith.mulf %184, %183 : vector<8x1xf32>
      %186 = vector.extract_strided_slice %82 {offsets = [1, 0], sizes = [1, 128], strides = [1, 1]} : vector<2x128xf32> to vector<1x128xf32>
      %cst_67 = arith.constant 0.000000e+00 : f32
      %187 = vector.broadcast %cst_67 : f32 to vector<1x128xf32>
      %188 = arith.subf %187, %186 : vector<1x128xf32>
      %189 = vector.extract_strided_slice %91 {offsets = [1, 0], sizes = [1, 128], strides = [1, 1]} : vector<2x128xf32> to vector<1x128xf32>
      %190 = vector.extract_strided_slice %85 {offsets = [1, 0], sizes = [1, 1], strides = [1, 1]} : vector<2x1xf32> to vector<1x1xf32>
      %191 = vector.extract_strided_slice %97 {offsets = [1, 0], sizes = [1, 1], strides = [1, 1]} : vector<2x1xf32> to vector<1x1xf32>
      %192 = vector.extract_strided_slice %103 {offsets = [1, 0], sizes = [1, 1], strides = [1, 1]} : vector<2x1xf32> to vector<1x1xf32>
      %193 = vector.broadcast %188 : vector<1x128xf32> to vector<8x128xf32>
      %194 = arith.mulf %193, %63 : vector<8x128xf32>
      %cst_68 = arith.constant dense<0.000000e+00> : vector<8xf32>
      %195 = vector.multi_reduction <add>, %194, %cst_68 [1] : vector<8x128xf32> to vector<8xf32>
      %196 = vector.shape_cast %195 : vector<8xf32> to vector<8x1xf32>
      %cst_69 = arith.constant 2.000000e-01 : f32
      %197 = vector.broadcast %cst_69 : f32 to vector<8x1xf32>
      %198 = arith.mulf %197, %196 : vector<8x1xf32>
      %cst_70 = arith.constant 1.000000e+00 : f32
      %199 = vector.broadcast %cst_70 : f32 to vector<8x1xf32>
      %200 = arith.addf %199, %198 : vector<8x1xf32>
      %cst_71 = arith.constant 1.000000e-01 : f32
      %201 = vector.broadcast %cst_71 : f32 to vector<8x1xf32>
      %202 = arith.mulf %201, %106 : vector<8x1xf32>
      %203 = arith.addf %200, %202 : vector<8x1xf32>
      %204 = vector.broadcast %203 : vector<8x1xf32> to vector<8x128xf32>
      %205 = vector.broadcast %188 : vector<1x128xf32> to vector<8x128xf32>
      %206 = arith.mulf %204, %205 : vector<8x128xf32>
      %cst_72 = arith.constant 1.000000e-01 : f32
      %207 = vector.broadcast %cst_72 : f32 to vector<1x1xf32>
      %208 = arith.mulf %207, %190 : vector<1x1xf32>
      %cst_73 = arith.constant 1.000000e+00 : f32
      %209 = vector.broadcast %cst_73 : f32 to vector<1x1xf32>
      %210 = arith.subf %209, %208 : vector<1x1xf32>
      %211 = vector.broadcast %210 : vector<1x1xf32> to vector<8x128xf32>
      %212 = arith.mulf %211, %63 : vector<8x128xf32>
      %213 = arith.addf %206, %212 : vector<8x128xf32>
      %cst_74 = arith.constant 2.000000e-01 : f32
      %214 = vector.broadcast %cst_74 : f32 to vector<8x1xf32>
      %215 = arith.mulf %214, %196 : vector<8x1xf32>
      %cst_75 = arith.constant 1.000000e+00 : f32
      %216 = vector.broadcast %cst_75 : f32 to vector<8x1xf32>
      %217 = arith.addf %216, %215 : vector<8x1xf32>
      %cst_76 = arith.constant 0.00999999977 : f32
      %218 = vector.broadcast %cst_76 : f32 to vector<1x1xf32>
      %219 = arith.mulf %218, %190 : vector<1x1xf32>
      %220 = vector.broadcast %219 : vector<1x1xf32> to vector<8x1xf32>
      %221 = arith.mulf %220, %106 : vector<8x1xf32>
      %222 = arith.addf %217, %221 : vector<8x1xf32>
      %cst_77 = arith.constant 9.99999974E-6 : f32
      %223 = vector.broadcast %cst_77 : f32 to vector<8x1xf32>
      %224 = arith.addf %222, %223 : vector<8x1xf32>
      %225 = tpu.reciprocal %224 {approx = true} : vector<8x1xf32> -> vector<8x1xf32>
      %226 = vector.broadcast %225 : vector<8x1xf32> to vector<8x128xf32>
      %227 = arith.mulf %213, %226 : vector<8x128xf32>
      %228 = vector.broadcast %189 : vector<1x128xf32> to vector<8x128xf32>
      %229 = arith.mulf %227, %228 : vector<8x128xf32>
      %cst_78 = arith.constant dense<0.000000e+00> : vector<8xf32>
      %230 = vector.multi_reduction <add>, %229, %cst_78 [1] : vector<8x128xf32> to vector<8xf32>
      %231 = vector.shape_cast %230 : vector<8xf32> to vector<8x1xf32>
      %cst_79 = arith.constant 0.632455527 : f32
      %232 = vector.broadcast %cst_79 : f32 to vector<8x1xf32>
      %233 = arith.mulf %232, %231 : vector<8x1xf32>
      %234 = arith.mulf %227, %227 : vector<8x128xf32>
      %cst_80 = arith.constant dense<0.000000e+00> : vector<8xf32>
      %235 = vector.multi_reduction <add>, %234, %cst_80 [1] : vector<8x128xf32> to vector<8xf32>
      %236 = vector.shape_cast %235 : vector<8xf32> to vector<8x1xf32>
      %cst_81 = arith.constant 1.000000e-01 : f32
      %237 = vector.broadcast %cst_81 : f32 to vector<8x1xf32>
      %238 = arith.mulf %237, %236 : vector<8x1xf32>
      %cst_82 = arith.constant 1.000000e+00 : f32
      %239 = vector.broadcast %cst_82 : f32 to vector<8x1xf32>
      %240 = arith.subf %239, %238 : vector<8x1xf32>
      %241 = vector.broadcast %191 : vector<1x1xf32> to vector<8x1xf32>
      %242 = arith.mulf %241, %240 : vector<8x1xf32>
      %243 = math.absf %242 : vector<8x1xf32>
      %cst_83 = arith.constant 1.000000e-10 : f32
      %244 = vector.broadcast %cst_83 : f32 to vector<8x1xf32>
      %245 = arith.cmpf olt, %243, %244 : vector<8x1xf32>
      %cst_84 = arith.constant 1.000000e-10 : f32
      %246 = vector.broadcast %cst_84 : f32 to vector<8x1xf32>
      %247 = arith.select %245, %246, %242 : vector<8x1xi1>, vector<8x1xf32>
      %248 = tpu.reciprocal %247 {approx = true} : vector<8x1xf32> -> vector<8x1xf32>
      %249 = arith.mulf %233, %248 : vector<8x1xf32>
      %250 = math.absf %249 : vector<8x1xf32>
      %cst_85 = arith.constant 0.000000e+00 : f32
      %251 = vector.broadcast %cst_85 : f32 to vector<8x1xf32>
      %252 = arith.cmpf oge, %249, %251 : vector<8x1xf32>
      %cst_86 = arith.constant 1.000000e+00 : f32
      %cst_87 = arith.constant -1.000000e+00 : f32
      %253 = vector.broadcast %cst_86 : f32 to vector<8x1xf32>
      %254 = vector.broadcast %cst_87 : f32 to vector<8x1xf32>
      %255 = arith.select %252, %253, %254 : vector<8x1xi1>, vector<8x1xf32>
      %256 = arith.mulf %250, %250 : vector<8x1xf32>
      %cst_88 = arith.constant 1.000000e+00 : f32
      %257 = vector.broadcast %cst_88 : f32 to vector<8x1xf32>
      %258 = arith.addf %256, %257 : vector<8x1xf32>
      %259 = math.sqrt %258 : vector<8x1xf32>
      %260 = arith.addf %250, %259 : vector<8x1xf32>
      %261 = math.log %260 : vector<8x1xf32>
      %262 = arith.mulf %255, %261 : vector<8x1xf32>
      %263 = vector.broadcast %192 : vector<1x1xf32> to vector<8x1xf32>
      %264 = arith.mulf %263, %262 : vector<8x1xf32>
      %265 = arith.maximumf %185, %264 : vector<8x1xf32>
      %cst_89 = arith.constant 0.000000e+00 : f32
      %266 = vector.broadcast %cst_89 : f32 to vector<8x1xf32>
      %267 = arith.subf %185, %265 : vector<8x1xf32>
      %268 = math.exp %267 : vector<8x1xf32>
      %269 = arith.addf %266, %268 : vector<8x1xf32>
      %270 = arith.subf %264, %265 : vector<8x1xf32>
      %271 = math.exp %270 : vector<8x1xf32>
      %272 = arith.addf %269, %271 : vector<8x1xf32>
      %273 = math.log %272 : vector<8x1xf32>
      %274 = arith.addf %265, %273 : vector<8x1xf32>
      %275 = tpu.iota {dimensions = array<i32: 1>} : vector<8x128xi32>
      %cst_90 = arith.constant 0.000000e+00 : f32
      %276 = vector.broadcast %cst_90 : f32 to vector<8x128xf32>
      %c0_i32_91 = arith.constant 0 : i32
      %277 = vector.broadcast %c0_i32_91 : i32 to vector<8x128xi32>
      %278 = arith.cmpi eq, %275, %277 : vector<8x128xi32>
      %279 = arith.subf %185, %274 : vector<8x1xf32>
      %280 = vector.shape_cast %279 : vector<8x1xf32> to vector<8x1xf32>
      %281 = vector.broadcast %280 : vector<8x1xf32> to vector<8x128xf32>
      %282 = arith.select %278, %281, %276 : vector<8x128xi1>, vector<8x128xf32>
      %c1_i32_92 = arith.constant 1 : i32
      %283 = vector.broadcast %c1_i32_92 : i32 to vector<8x128xi32>
      %284 = arith.cmpi eq, %275, %283 : vector<8x128xi32>
      %285 = arith.subf %264, %274 : vector<8x1xf32>
      %286 = vector.shape_cast %285 : vector<8x1xf32> to vector<8x1xf32>
      %287 = vector.broadcast %286 : vector<8x1xf32> to vector<8x128xf32>
      %288 = arith.select %284, %287, %282 : vector<8x128xi1>, vector<8x128xf32>
      %c0_93 = arith.constant 0 : index
      %c0_94 = arith.constant 0 : index
      %289 = vector.load %arg9[%c0_93, %c0_94] : memref<8x128xf32, #tpu.memory_space<vmem>>, vector<8x128xf32>
      tpu.vector_store %arg9[%c0_93, %c0_94], %288 {strides = array<i32>} : memref<8x128xf32, #tpu.memory_space<vmem>>, vector<8x128xf32>,
    } else {
    }
    return
  }
  func.func @transform_0(%arg0: i32, %arg1: i32) -> (i32, i32) {
    %c0_i32 = arith.constant 0 : i32
    return %arg0, %arg1 : i32, i32
  }
  func.func @transform_1(%arg0: i32, %arg1: i32) -> (i32, i32) {
    %c0_i32 = arith.constant 0 : i32
    return %arg0, %arg1 : i32, i32
  }
  func.func @transform_2(%arg0: i32, %arg1: i32) -> (i32, i32) {
    %c0_i32 = arith.constant 0 : i32
    %c0_i32_0 = arith.constant 0 : i32
    return %arg1, %c0_i32 : i32, i32
  }
  func.func @transform_3(%arg0: i32, %arg1: i32) -> (i32, i32) {
    %c0_i32 = arith.constant 0 : i32
    %c0_i32_0 = arith.constant 0 : i32
    %c0_i32_1 = arith.constant 0 : i32
    return %c0_i32, %c0_i32_0 : i32, i32
  }
  func.func @transform_4(%arg0: i32, %arg1: i32) -> (i32, i32) {
    %c0_i32 = arith.constant 0 : i32
    %c0_i32_0 = arith.constant 0 : i32
    %c0_i32_1 = arith.constant 0 : i32
    return %c0_i32, %c0_i32_0 : i32, i32
  }
  func.func @transform_5(%arg0: i32, %arg1: i32) -> (i32, i32) {
    %c0_i32 = arith.constant 0 : i32
    %c0_i32_0 = arith.constant 0 : i32
    %c0_i32_1 = arith.constant 0 : i32
    return %c0_i32, %c0_i32_0 : i32, i32
  }
  func.func @transform_6(%arg0: i32, %arg1: i32) -> (i32, i32) {
    %c0_i32 = arith.constant 0 : i32
    %c0_i32_0 = arith.constant 0 : i32
    return %arg0, %c0_i32 : i32, i32
  }
  func.func @transform_7(%arg0: i32, %arg1: i32) -> (i32, i32) {
    %c0_i32 = arith.constant 0 : i32
    %c0_i32_0 = arith.constant 0 : i32
    return %arg0, %c0_i32 : i32, i32
  }
}

</mosaic_0001>

<llo_original>
// kernel: siamese_forward.2
$region0: #{siamese_forward.2}
  #allocation0 [shape = 'u32[]', space=smem, size = 0x4, offset = 0x4, fixed_abs, tag = 'smem constant byte address 0x4 - core index']
  #allocation1 [shape = 'u32[72,128]{1,0:T(1,128)}', space=vmem, size = 0x9000, scoped, tag = 'internal scratch']
  %s0 = inlined_call_operand.vmem [shape: bf16[256,36], index: 0, kind: input, shape index: {}]
  %s1 = inlined_call_operand.vmem [shape: bf16[36,8], index: 1, kind: input, shape index: {}]
  %s2 = inlined_call_operand.vmem [shape: f32[1,8], index: 2, kind: input, shape index: {}]
  %s3 = inlined_call_operand.vmem [shape: f32[256,8], index: 3, kind: output, shape index: {}]
  %s4 = sld [smem:[#allocation0]]
  $region45: #{siamese_forward.2} parent=0
    _
  %s6 = ssub.s32 1, %s4
  %s7 = scalar_select 0, %s6, %s4
  loop: start=0, step=1, limit=4
  $region2: #{siamese_forward.2} parent=0 // loop_pre_header
    _
  $region3: #{siamese_forward.2} parent=0 // loop_header
    %s9 = sphi 0, %s13
    %p10 = scmp.ge.s32.totalorder %s9, 4
    %s19 = sphi 0, %s21
    %s22 = sphi 0, %s19
    %s23 = sphi 0, %s22
    %s39 = sphi 0, %s23
    %s43 = sphi 0, %s43
    %s45 = sphi 0, %s43
    %s46 = sphi 0, %s45
    %s60 = sphi 0, %s46
    %s64 = sphi 0, %s64
    %s66 = sphi 0, %s64
    %s67 = sphi 0, %s66
    %s81 = sphi 0, %s67
    %s87 = sphi 0, %s89
    %s90 = sphi 0, %s87
    %s91 = sphi 0, %s90
    %s107 = sphi 0, %s91
  $region4: #{siamese_forward.2} parent=0 // loop_header_branch
    %12 = sbr.rel (%p10) target = $region8
  $region5: #{siamese_forward.2} parent=0 // loop_body
    %s14 = ssub.s32 %s9, 1
    %s15 = ssub.s32 %s9, 2
    %s16 = sadd.s32 %s9, 1
    %s17 = ssub.s32 %s9, %s16
    %p18 = scmp.eq.s32.totalorder %s17, 0
    %s20 = sadd.s32 %s19, 1
    %s21 = scalar_select %p18, %s19, %s20
    %p24 = pneg %p18
    %p25 = scmp.eq.s32.totalorder %s9, 1
    %p26 = por %p24, %p25
    %p27 = scmp.ne.s32.totalorder %s19, %s22
    %p28 = scmp.eq.s32.totalorder %s9, 0
    %p29 = por %p27, %p28
    %p30 = scmp.ne.s32.totalorder %s19, %s22
    %p31 = scmp.eq.s32.totalorder %s14, 1
    %p32 = por %p30, %p31
    %p33 = scmp.ne.s32.totalorder %s22, %s23
    %p34 = scmp.eq.s32.totalorder %s14, 0
    %p35 = por %p33, %p34
    %p36 = scmp.ne.s32.totalorder %s22, %s23
    %p37 = scmp.eq.s32.totalorder %s15, 1
    %p38 = por %p36, %p37
    %p40 = scmp.ne.s32.totalorder %s23, %s39
    %p41 = scmp.eq.s32.totalorder %s15, 0
    %p42 = por %p40, %p41
    %s44 = sadd.s32 %s43, 1
    %p47 = scmp.eq.s32.totalorder %s9, 1
    %p48 = scmp.ne.s32.totalorder %s43, %s45
    %p49 = scmp.eq.s32.totalorder %s9, 0
    %p50 = por %p48, %p49
    %p51 = scmp.ne.s32.totalorder %s43, %s45
    %p52 = scmp.eq.s32.totalorder %s14, 1
    %p53 = por %p51, %p52
    %p54 = scmp.ne.s32.totalorder %s45, %s46
    %p55 = scmp.eq.s32.totalorder %s14, 0
    %p56 = por %p54, %p55
    %p57 = scmp.ne.s32.totalorder %s45, %s46
    %p58 = scmp.eq.s32.totalorder %s15, 1
    %p59 = por %p57, %p58
    %p61 = scmp.ne.s32.totalorder %s46, %s60
    %p62 = scmp.eq.s32.totalorder %s15, 0
    %p63 = por %p61, %p62
    %s65 = sadd.s32 %s64, 1
    %p68 = scmp.eq.s32.totalorder %s9, 1
    %p69 = scmp.ne.s32.totalorder %s64, %s66
    %p70 = scmp.eq.s32.totalorder %s9, 0
    %p71 = por %p69, %p70
    %p72 = scmp.ne.s32.totalorder %s64, %s66
    %p73 = scmp.eq.s32.totalorder %s14, 1
    %p74 = por %p72, %p73
    %p75 = scmp.ne.s32.totalorder %s66, %s67
    %p76 = scmp.eq.s32.totalorder %s14, 0
    %p77 = por %p75, %p76
    %p78 = scmp.ne.s32.totalorder %s66, %s67
    %p79 = scmp.eq.s32.totalorder %s15, 1
    %p80 = por %p78, %p79
    %p82 = scmp.ne.s32.totalorder %s67, %s81
    %p83 = scmp.eq.s32.totalorder %s15, 0
    %p84 = por %p82, %p83
    %s85 = ssub.s32 %s9, %s16
    %p86 = scmp.eq.s32.totalorder %s85, 0
    %s88 = sadd.s32 %s87, 1
    %s89 = scalar_select %p86, %s87, %s88
    %p92 = pneg %p86
    %p93 = scmp.eq.s32.totalorder %s9, 1
    %p94 = por %p92, %p93
    %p95 = scmp.ne.s32.totalorder %s87, %s90
    %p96 = scmp.eq.s32.totalorder %s9, 0
    %p97 = por %p95, %p96
    %p98 = scmp.ne.s32.totalorder %s87, %s90
    %p99 = scmp.eq.s32.totalorder %s14, 1
    %p100 = por %p98, %p99
    %p101 = scmp.ne.s32.totalorder %s90, %s91
    %p102 = scmp.eq.s32.totalorder %s14, 0
    %p103 = por %p101, %p102
    %p104 = scmp.ne.s32.totalorder %s90, %s91
    %p105 = scmp.eq.s32.totalorder %s15, 1
    %p106 = por %p104, %p105
    %p108 = scmp.ne.s32.totalorder %s91, %s107
    %p109 = scmp.eq.s32.totalorder %s15, 0
    %p110 = por %p108, %p109
    %p111 = scmp.le.s32.totalorder 1, %s9
    %p112 = scmp.lt.s32.totalorder %s9, 3
    %p113 = pnand %p111, %p112
    %p114 = pneg %p113
    // Predicated region
    $region9: #{siamese_forward.2} parent=5 // pred_check
      _
    $region10: #{siamese_forward.2} parent=5 // pred_check_branch
      %116 = sbr.rel (%p113) target = $region12
    $region11: #{siamese_forward.2} parent=5 // pred_region
      %s117 = ssub.s32 %s9, 1
      // Predicated region
      $region13: #{siamese_forward.2} parent=11 // pred_check
        %p118 = pneg %p56
      $region14: #{siamese_forward.2} parent=11 // pred_check_branch
        %120 = sbr.rel (%p118) target = $region16
      $region15: #{siamese_forward.2} parent=11 // pred_region
        _
      $region16: #{siamese_forward.2} parent=11 // pred_fallthru
        _
      // Predicated region
      $region17: #{siamese_forward.2} parent=11 // pred_check
        %p121 = pneg %p77
      $region18: #{siamese_forward.2} parent=11 // pred_check_branch
        %123 = sbr.rel (%p121) target = $region20
      $region19: #{siamese_forward.2} parent=11 // pred_region
        _
      $region20: #{siamese_forward.2} parent=11 // pred_fallthru
        _
    $region12: #{siamese_forward.2} parent=5 // pred_fallthru
      _
    %p124 = scmp.lt.s32.totalorder %s9, 2
    // Predicated region
    $region21: #{siamese_forward.2} parent=5 // pred_check
      %p125 = pneg %p124
    $region22: #{siamese_forward.2} parent=5 // pred_check_branch
      %127 = sbr.rel (%p125) target = $region24
    $region23: #{siamese_forward.2} parent=5 // pred_region
      // Predicated region
      $region25: #{siamese_forward.2} parent=23 // pred_check
        %p128 = pneg %p29
      $region26: #{siamese_forward.2} parent=23 // pred_check_branch
        %130 = sbr.rel (%p128) target = $region28
      $region27: #{siamese_forward.2} parent=23 // pred_region
        %s131 = smul.u32 16, %s9
        %p132 = scmp.lt.s32.totalorder %s131, 31
        %s133 = scalar_select %p132, %s131, 31
        %s134 = smul.addr %s133, 4
        %s135 = scalar_lea.vmem %s0, %s134
        %s136 = smul.u32 16, %s9
      $region28: #{siamese_forward.2} parent=23 // pred_fallthru
        _
    $region24: #{siamese_forward.2} parent=5 // pred_fallthru
      _
    %p137 = scmp.le.s32.totalorder 1, %s9
    %p138 = scmp.lt.s32.totalorder %s9, 3
    %p139 = pnand %p137, %p138
    %p140 = pneg %p139
    // Predicated region
    $region29: #{siamese_forward.2} parent=5 // pred_check
      _
    $region30: #{siamese_forward.2} parent=5 // pred_check_branch
      %142 = sbr.rel (%p139) target = $region32
    $region31: #{siamese_forward.2} parent=5 // pred_region
      %s143 = ssub.s32 %s9, 1
      %s144 = smul.u32 16, %s14
      %p145 = scmp.lt.s32.totalorder %s144, 31
      %s146 = scalar_select %p145, %s144, 31
      %s147 = smul.addr %s146, 4
      %s148 = scalar_lea.vmem %s0, %s147
      %p149 = pneg %p35
      %p150 = pneg %p32
      %p151 = pneg %p56
      %p152 = pneg %p53
      %p153 = pneg %p77
      %p154 = pneg %p74
      %p155 = pneg %p103
      %p156 = pneg %p100
      %s157 = smul.u32 16, %s14
      %p158 = scmp.lt.s32.totalorder %s157, 31
      %s159 = scalar_select %p158, %s157, 31
      %s160 = smul.addr %s159, 8
      %s161 = scalar_lea.vmem %s3, %s160
      %s162 = smul.u32 16, %s14
      %p163 = scmp.lt.s32.totalorder %s162, 31
      %s164 = scalar_select %p163, %s162, 31
      %s165 = smul.addr %s164, 4
      %s166 = scalar_lea.vmem %s0, %s165
      %s167 = smul.u32 16, %s14
      %s168 = smul.u32 16, %s14
      %p169 = scmp.lt.s32.totalorder %s168, 31
      %s170 = scalar_select %p169, %s168, 31
      %s171 = smul.addr %s170, 8
      %s172 = scalar_lea.vmem %s3, %s171
      %s173 = smul.u32 16, %s14
      %v175 = vld [vmem:[%s166] sm:$0xf]
      %v176 = vld [vmem:[%s166 + $0x4] sm:$0xf]
      %v177 = vld [vmem:[%s166 + $0x8] sm:$0xf]
      %v178 = vld [vmem:[%s166 + $0xc] sm:$0xf]
      %v179 = vld [vmem:[%s166 + $0x10] sm:$0xf]
      %v180 = vld [vmem:[%s166 + $0x14] sm:$0xf]
      %v181 = vld [vmem:[%s166 + $0x18] sm:$0xf]
      %v182 = vld [vmem:[%s166 + $0x1c] sm:$0xf]
      %v183 = vld [vmem:[%s166 + $0x20] sm:$0xf]
      %v184 = vld [vmem:[%s166 + $0x24] sm:$0xf]
      %v185 = vld [vmem:[%s166 + $0x28] sm:$0xf]
      %v186 = vld [vmem:[%s166 + $0x2c] sm:$0xf]
      %v187 = vld [vmem:[%s166 + $0x30] sm:$0xf]
      %v188 = vld [vmem:[%s166 + $0x34] sm:$0xf]
      %v189 = vld [vmem:[%s166 + $0x38] sm:$0xf]
      %v190 = vld [vmem:[%s166 + $0x3c] sm:$0xf]
      %v191 = vld [vmem:[%s1] sm:$0xf]
      %v192 = vld [vmem:[%s1 + $0x4] sm:$0xf]
      %v193 = vld [vmem:[%s1 + $0x8] sm:$0xf]
      %v194 = vld [vmem:[%s1 + $0xc] sm:$0xf]
      %v195 = vld [vmem:[%s1 + $0x10] sm:$0x3]
      %v196 = vld [vmem:[%s2] sm:$0x1]
      %v198 = vperm.slane %v196, 0
      %v216 = vunpack.c.l.b16 %v175
      %v217 = vunpack.c.l.b16 %v176
      %v218 = vunpack.c.l.b16 %v177
      %v219 = vunpack.c.l.b16 %v178
      %v220 = vunpack.c.l.b16 %v179
      %v221 = vunpack.c.l.b16 %v180
      %v222 = vunpack.c.l.b16 %v181
      %v223 = vunpack.c.l.b16 %v182
      %v224 = vunpack.c.l.b16 %v183
      %v225 = vunpack.c.l.b16 %v184
      %v226 = vunpack.c.l.b16 %v185
      %v227 = vunpack.c.l.b16 %v186
      %v228 = vunpack.c.l.b16 %v187
      %v229 = vunpack.c.l.b16 %v188
      %v230 = vunpack.c.l.b16 %v189
      %v231 = vunpack.c.l.b16 %v190
      %v232 = vpack.c.b16 %v217, %v216
      %v233 = vpack.c.b16 %v219, %v218
      %v234 = vpack.c.b16 %v221, %v220
      %v235 = vpack.c.b16 %v223, %v222
      %v236 = vpack.c.b16 %v225, %v224
      %v237 = vpack.c.b16 %v227, %v226
      %v238 = vpack.c.b16 %v229, %v228
      %v239 = vpack.c.b16 %v231, %v230
      %v245 = vunpack.c.l.b16 %v191
      %v246 = vunpack.c.l.b16 %v192
      %v247 = vunpack.c.l.b16 %v193
      %v248 = vunpack.c.l.b16 %v194
      %v249 = vunpack.c.l.b16 %v195
      %v250 = vpack.c.b16 %v246, %v245
      %v251 = vpack.c.b16 %v248, %v247
      %v252 = vpack.c.b16 %v249, %v249
      %vm255 = vcmask 293888
      %v257 = vsel %vm255, %v232, 0
      %v260 = vsel %vm255, %v233, 0
      %v263 = vsel %vm255, %v234, 0
      %v266 = vsel %vm255, %v235, 0
      %v269 = vsel %vm255, %v236, 0
      %v272 = vsel %vm255, %v237, 0
      %v275 = vsel %vm255, %v238, 0
      %v278 = vsel %vm255, %v239, 0
      %vm280 = vcmask 1041408
      %v282 = vsel %vm280, %v252, 0
      %284 = vmatpush.bf16.msra.mxu0 0
      %285 = vmatpush.bf16.msra.mxu0 0
      %286 = vmatpush.bf16.msra.mxu0 0
      %287 = vmatpush.bf16.msra.mxu0 0
      %288 = vmatpush.bf16.msra.mxu0 0
      %289 = vmatpush.bf16.msra.mxu0 %v282
      %290 = vmatpush.bf16.msra.mxu0 %v251
      %291 = vmatpush.bf16.msra.mxu0 %v250
      %292 = vmatmul.bf16.gmra.mxu0 %v257
      %v293 = vpop.f32.mrf.mxu0
      %v294 = vadd.f32 %v198, %v293
      %v295 = vpop.f32.mrf.mxu0
      %v296 = vadd.f32 %v198, %v295
      %297 = vmatmul.bf16.gmra.mxu0 %v260
      %v298 = vpop.f32.mrf.mxu0
      %v299 = vadd.f32 %v198, %v298
      %v300 = vpop.f32.mrf.mxu0
      %v301 = vadd.f32 %v198, %v300
      %302 = vmatmul.bf16.gmra.mxu0 %v263
      %v303 = vpop.f32.mrf.mxu0
      %v304 = vadd.f32 %v198, %v303
      %v305 = vpop.f32.mrf.mxu0
      %v306 = vadd.f32 %v198, %v305
      %307 = vmatmul.bf16.gmra.mxu0 %v266
      %v308 = vpop.f32.mrf.mxu0
      %v309 = vadd.f32 %v198, %v308
      %v310 = vpop.f32.mrf.mxu0
      %v311 = vadd.f32 %v198, %v310
      %312 = vmatmul.bf16.gmra.mxu0 %v269
      %v313 = vpop.f32.mrf.mxu0
      %v314 = vadd.f32 %v198, %v313
      %v315 = vpop.f32.mrf.mxu0
      %v316 = vadd.f32 %v198, %v315
      %317 = vmatmul.bf16.gmra.mxu0 %v272
      %v318 = vpop.f32.mrf.mxu0
      %v319 = vadd.f32 %v198, %v318
      %v320 = vpop.f32.mrf.mxu0
      %v321 = vadd.f32 %v198, %v320
      %322 = vmatmul.bf16.gmra.mxu0 %v275
      %v323 = vpop.f32.mrf.mxu0
      %v324 = vadd.f32 %v198, %v323
      %v325 = vpop.f32.mrf.mxu0
      %v326 = vadd.f32 %v198, %v325
      %327 = vmatmul.bf16.gmra.mxu0 %v278
      %v328 = vpop.f32.mrf.mxu0
      %v329 = vadd.f32 %v198, %v328
      %v330 = vpop.f32.mrf.mxu0
      %v331 = vadd.f32 %v198, %v330
      %332 = vdwg.mxu0
      %v333 = vmax.f32 %v294, 0.0
      %v334 = vmax.f32 %v296, 0.0
      %v335 = vmax.f32 %v299, 0.0
      %v336 = vmax.f32 %v301, 0.0
      %v337 = vmax.f32 %v304, 0.0
      %v338 = vmax.f32 %v306, 0.0
      %v339 = vmax.f32 %v309, 0.0
      %v340 = vmax.f32 %v311, 0.0
      %v341 = vmax.f32 %v314, 0.0
      %v342 = vmax.f32 %v316, 0.0
      %v343 = vmax.f32 %v319, 0.0
      %v344 = vmax.f32 %v321, 0.0
      %v345 = vmax.f32 %v324, 0.0
      %v346 = vmax.f32 %v326, 0.0
      %v347 = vmax.f32 %v329, 0.0
      %v348 = vmax.f32 %v331, 0.0
      %vm349 = vcmask 64512
      %350 = vst.msk [vmem:[%s172] sm:$0xff] %vm349, %v333
      %351 = vst.msk [vmem:[%s172 + $0x8] sm:$0xff] %vm349, %v334
      %352 = vst.msk [vmem:[%s172 + $0x10] sm:$0xff] %vm349, %v335
      %353 = vst.msk [vmem:[%s172 + $0x18] sm:$0xff] %vm349, %v336
      %354 = vst.msk [vmem:[%s172 + $0x20] sm:$0xff] %vm349, %v337
      %355 = vst.msk [vmem:[%s172 + $0x28] sm:$0xff] %vm349, %v338
      %356 = vst.msk [vmem:[%s172 + $0x30] sm:$0xff] %vm349, %v339
      %357 = vst.msk [vmem:[%s172 + $0x38] sm:$0xff] %vm349, %v340
      %358 = vst.msk [vmem:[%s172 + $0x40] sm:$0xff] %vm349, %v341
      %359 = vst.msk [vmem:[%s172 + $0x48] sm:$0xff] %vm349, %v342
      %360 = vst.msk [vmem:[%s172 + $0x50] sm:$0xff] %vm349, %v343
      %361 = vst.msk [vmem:[%s172 + $0x58] sm:$0xff] %vm349, %v344
      %362 = vst.msk [vmem:[%s172 + $0x60] sm:$0xff] %vm349, %v345
      %363 = vst.msk [vmem:[%s172 + $0x68] sm:$0xff] %vm349, %v346
      %364 = vst.msk [vmem:[%s172 + $0x70] sm:$0xff] %vm349, %v347
      %365 = vst.msk [vmem:[%s172 + $0x78] sm:$0xff] %vm349, %v348
      %s366 = smul.u32 16, %s14
      %p367 = scmp.lt.s32.totalorder %s366, 31
      %s368 = scalar_select %p367, %s366, 31
      %s369 = smul.addr %s368, 8
      %s370 = scalar_lea.vmem %s3, %s369
      // Predicated region
      $region33: #{siamese_forward.2} parent=31 // pred_check
        %p371 = pneg %p100
      $region34: #{siamese_forward.2} parent=31 // pred_check_branch
        %373 = sbr.rel (%p371) target = $region36
      $region35: #{siamese_forward.2} parent=31 // pred_region
        %s374 = smul.u32 16, %s14
      $region36: #{siamese_forward.2} parent=31 // pred_fallthru
        _
    $region32: #{siamese_forward.2} parent=5 // pred_fallthru
      _
    %p375 = scmp.le.s32.totalorder 2, %s9
    // Predicated region
    $region37: #{siamese_forward.2} parent=5 // pred_check
      %p376 = pneg %p375
    $region38: #{siamese_forward.2} parent=5 // pred_check_branch
      %378 = sbr.rel (%p376) target = $region40
    $region39: #{siamese_forward.2} parent=5 // pred_region
      %s379 = ssub.s32 %s9, 2
      // Predicated region
      $region41: #{siamese_forward.2} parent=39 // pred_check
        %p380 = pneg %p106
      $region42: #{siamese_forward.2} parent=39 // pred_check_branch
        %382 = sbr.rel (%p380) target = $region44
      $region43: #{siamese_forward.2} parent=39 // pred_region
        %s383 = smul.u32 16, %s15
        %p384 = scmp.lt.s32.totalorder %s383, 31
        %s385 = scalar_select %p384, %s383, 31
        %s386 = smul.addr %s385, 8
        %s387 = scalar_lea.vmem %s3, %s386
      $region44: #{siamese_forward.2} parent=39 // pred_fallthru
        _
    $region40: #{siamese_forward.2} parent=5 // pred_fallthru
      _
  $region6: #{siamese_forward.2} parent=0 // loop_footer
    %s13 = sadd.s32 1, %s9
  $region7: #{siamese_forward.2} parent=0 // loop_footer_branch
    %8 = sbr.rel target = $region3
  $region8: #{siamese_forward.2} parent=0 // loop_exit
    _

// kernel: siamese_forward.3
$region0: #{siamese_forward.3}
  #allocation0 [shape = 'u32[]', space=smem, size = 0x4, offset = 0x4, fixed_abs, tag = 'smem constant byte address 0x4 - core index']
  #allocation1 [shape = 'u32[72,128]{1,0:T(1,128)}', space=vmem, size = 0x9000, scoped, tag = 'internal scratch']
  #allocation2 [shape = 'f32[8,128]{1,0:T(8,128)}', space=vmem, size = 0x1000, scoped, tag = 'scratch operand']
  %s0 = inlined_call_operand.vmem [shape: bf16[8,512], index: 0, kind: input, shape index: {}]
  %s1 = inlined_call_operand.vmem [shape: bf16[8,512], index: 1, kind: input, shape index: {}]
  %s2 = inlined_call_operand.vmem [shape: bf16[512,128], index: 2, kind: input, shape index: {}]
  %s3 = inlined_call_operand.vmem [shape: f32[1,128], index: 3, kind: input, shape index: {}]
  %s4 = inlined_call_operand.vmem [shape: f32[2,128], index: 4, kind: input, shape index: {}]
  %s5 = inlined_call_operand.vmem [shape: f32[2,128], index: 5, kind: input, shape index: {}]
  %s6 = inlined_call_operand.vmem [shape: f32[8,128], index: 6, kind: output, shape index: {0}]
  %s7 = inlined_call_operand.vmem [shape: f32[8,128], index: 7, kind: output, shape index: {1}]
  %8 = xla_tuple %s6, %s7
  %s9 = sld [smem:[#allocation0]]
  $region73: #{siamese_forward.3} parent=0
    _
  %s11 = ssub.s32 1, %s9
  %s12 = scalar_select 0, %s11, %s9
  loop: start=0, step=1, limit=4
  $region2: #{siamese_forward.3} parent=0 // loop_pre_header
    _
  $region3: #{siamese_forward.3} parent=0 // loop_header
    %s14 = sphi 0, %s18
    %p15 = scmp.ge.s32.totalorder %s14, 4
    %s21 = sphi 0, %s33
    %s22 = sphi 0, %s29
    %s23 = sphi 0, %s21
    %s24 = sphi 0, %s22
    %s25 = sphi 0, %s23
    %s26 = sphi 0, %s24
    %s38 = sphi 0, %s40
    %s41 = sphi 0, %s38
    %s42 = sphi 0, %s41
    %s58 = sphi 0, %s42
    %s66 = sphi 0, %s68
    %s69 = sphi 0, %s66
    %s70 = sphi 0, %s69
    %s86 = sphi 0, %s70
    %s92 = sphi 0, %s94
    %s95 = sphi 0, %s92
    %s96 = sphi 0, %s95
    %s112 = sphi 0, %s96
    %s116 = sphi 0, %s116
    %s118 = sphi 0, %s116
    %s119 = sphi 0, %s118
    %s133 = sphi 0, %s119
    %s137 = sphi 0, %s137
    %s139 = sphi 0, %s137
    %s140 = sphi 0, %s139
    %s154 = sphi 0, %s140
    %s158 = sphi 0, %s158
    %s160 = sphi 0, %s158
    %s161 = sphi 0, %s160
    %s175 = sphi 0, %s161
    %s181 = sphi 0, %s183
    %s184 = sphi 0, %s181
    %s185 = sphi 0, %s184
    %s201 = sphi 0, %s185
    %s207 = sphi 0, %s209
    %s210 = sphi 0, %s207
    %s211 = sphi 0, %s210
    %s227 = sphi 0, %s211
  $region4: #{siamese_forward.3} parent=0 // loop_header_branch
    %17 = sbr.rel (%p15) target = $region8
  $region5: #{siamese_forward.3} parent=0 // loop_body
    %s19 = ssub.s32 %s14, 1
    %s20 = ssub.s32 %s14, 2
    %s27 = sadd.s32 1, %s22
    %p28 = scmp.ge.s32.totalorder %s27, 2
    %s29 = scalar_select %p28, 0, %s27
    %s30 = sadd.s32 1, %s21
    %s31 = scalar_select %p28, %s30, %s21
    %p32 = scmp.ge.s32.totalorder %s31, 1
    %s33 = scalar_select %p32, 0, %s31
    %s34 = ssub.s32 %s21, %s33
    %s35 = ssub.s32 %s22, %s29
    %s36 = sor.u32 %s34, %s35
    %p37 = scmp.eq.s32.totalorder %s36, 0
    %s39 = sadd.s32 %s38, 1
    %s40 = scalar_select %p37, %s38, %s39
    %p43 = pneg %p37
    %p44 = scmp.eq.s32.totalorder %s14, 1
    %p45 = por %p43, %p44
    %p46 = scmp.ne.s32.totalorder %s38, %s41
    %p47 = scmp.eq.s32.totalorder %s14, 0
    %p48 = por %p46, %p47
    %p49 = scmp.ne.s32.totalorder %s38, %s41
    %p50 = scmp.eq.s32.totalorder %s19, 1
    %p51 = por %p49, %p50
    %p52 = scmp.ne.s32.totalorder %s41, %s42
    %p53 = scmp.eq.s32.totalorder %s19, 0
    %p54 = por %p52, %p53
    %p55 = scmp.ne.s32.totalorder %s41, %s42
    %p56 = scmp.eq.s32.totalorder %s20, 1
    %p57 = por %p55, %p56
    %p59 = scmp.ne.s32.totalorder %s42, %s58
    %p60 = scmp.eq.s32.totalorder %s20, 0
    %p61 = por %p59, %p60
    %s62 = ssub.s32 %s21, %s33
    %s63 = ssub.s32 %s22, %s29
    %s64 = sor.u32 %s62, %s63
    %p65 = scmp.eq.s32.totalorder %s64, 0
    %s67 = sadd.s32 %s66, 1
    %s68 = scalar_select %p65, %s66, %s67
    %p71 = pneg %p65
    %p72 = scmp.eq.s32.totalorder %s14, 1
    %p73 = por %p71, %p72
    %p74 = scmp.ne.s32.totalorder %s66, %s69
    %p75 = scmp.eq.s32.totalorder %s14, 0
    %p76 = por %p74, %p75
    %p77 = scmp.ne.s32.totalorder %s66, %s69
    %p78 = scmp.eq.s32.totalorder %s19, 1
    %p79 = por %p77, %p78
    %p80 = scmp.ne.s32.totalorder %s69, %s70
    %p81 = scmp.eq.s32.totalorder %s19, 0
    %p82 = por %p80, %p81
    %p83 = scmp.ne.s32.totalorder %s69, %s70
    %p84 = scmp.eq.s32.totalorder %s20, 1
    %p85 = por %p83, %p84
    %p87 = scmp.ne.s32.totalorder %s70, %s86
    %p88 = scmp.eq.s32.totalorder %s20, 0
    %p89 = por %p87, %p88
    %s90 = ssub.s32 %s22, %s29
    %p91 = scmp.eq.s32.totalorder %s90, 0
    %s93 = sadd.s32 %s92, 1
    %s94 = scalar_select %p91, %s92, %s93
    %p97 = pneg %p91
    %p98 = scmp.eq.s32.totalorder %s14, 1
    %p99 = por %p97, %p98
    %p100 = scmp.ne.s32.totalorder %s92, %s95
    %p101 = scmp.eq.s32.totalorder %s14, 0
    %p102 = por %p100, %p101
    %p103 = scmp.ne.s32.totalorder %s92, %s95
    %p104 = scmp.eq.s32.totalorder %s19, 1
    %p105 = por %p103, %p104
    %p106 = scmp.ne.s32.totalorder %s95, %s96
    %p107 = scmp.eq.s32.totalorder %s19, 0
    %p108 = por %p106, %p107
    %p109 = scmp.ne.s32.totalorder %s95, %s96
    %p110 = scmp.eq.s32.totalorder %s20, 1
    %p111 = por %p109, %p110
    %p113 = scmp.ne.s32.totalorder %s96, %s112
    %p114 = scmp.eq.s32.totalorder %s20, 0
    %p115 = por %p113, %p114
    %s117 = sadd.s32 %s116, 1
    %p120 = scmp.eq.s32.totalorder %s14, 1
    %p121 = scmp.ne.s32.totalorder %s116, %s118
    %p122 = scmp.eq.s32.totalorder %s14, 0
    %p123 = por %p121, %p122
    %p124 = scmp.ne.s32.totalorder %s116, %s118
    %p125 = scmp.eq.s32.totalorder %s19, 1
    %p126 = por %p124, %p125
    %p127 = scmp.ne.s32.totalorder %s118, %s119
    %p128 = scmp.eq.s32.totalorder %s19, 0
    %p129 = por %p127, %p128
    %p130 = scmp.ne.s32.totalorder %s118, %s119
    %p131 = scmp.eq.s32.totalorder %s20, 1
    %p132 = por %p130, %p131
    %p134 = scmp.ne.s32.totalorder %s119, %s133
    %p135 = scmp.eq.s32.totalorder %s20, 0
    %p136 = por %p134, %p135
    %s138 = sadd.s32 %s137, 1
    %p141 = scmp.eq.s32.totalorder %s14, 1
    %p142 = scmp.ne.s32.totalorder %s137, %s139
    %p143 = scmp.eq.s32.totalorder %s14, 0
    %p144 = por %p142, %p143
    %p145 = scmp.ne.s32.totalorder %s137, %s139
    %p146 = scmp.eq.s32.totalorder %s19, 1
    %p147 = por %p145, %p146
    %p148 = scmp.ne.s32.totalorder %s139, %s140
    %p149 = scmp.eq.s32.totalorder %s19, 0
    %p150 = por %p148, %p149
    %p151 = scmp.ne.s32.totalorder %s139, %s140
    %p152 = scmp.eq.s32.totalorder %s20, 1
    %p153 = por %p151, %p152
    %p155 = scmp.ne.s32.totalorder %s140, %s154
    %p156 = scmp.eq.s32.totalorder %s20, 0
    %p157 = por %p155, %p156
    %s159 = sadd.s32 %s158, 1
    %p162 = scmp.eq.s32.totalorder %s14, 1
    %p163 = scmp.ne.s32.totalorder %s158, %s160
    %p164 = scmp.eq.s32.totalorder %s14, 0
    %p165 = por %p163, %p164
    %p166 = scmp.ne.s32.totalorder %s158, %s160
    %p167 = scmp.eq.s32.totalorder %s19, 1
    %p168 = por %p166, %p167
    %p169 = scmp.ne.s32.totalorder %s160, %s161
    %p170 = scmp.eq.s32.totalorder %s19, 0
    %p171 = por %p169, %p170
    %p172 = scmp.ne.s32.totalorder %s160, %s161
    %p173 = scmp.eq.s32.totalorder %s20, 1
    %p174 = por %p172, %p173
    %p176 = scmp.ne.s32.totalorder %s161, %s175
    %p177 = scmp.eq.s32.totalorder %s20, 0
    %p178 = por %p176, %p177
    %s179 = ssub.s32 %s21, %s33
    %p180 = scmp.eq.s32.totalorder %s179, 0
    %s182 = sadd.s32 %s181, 1
    %s183 = scalar_select %p180, %s181, %s182
    %p186 = pneg %p180
    %p187 = scmp.eq.s32.totalorder %s14, 1
    %p188 = por %p186, %p187
    %p189 = scmp.ne.s32.totalorder %s181, %s184
    %p190 = scmp.eq.s32.totalorder %s14, 0
    %p191 = por %p189, %p190
    %p192 = scmp.ne.s32.totalorder %s181, %s184
    %p193 = scmp.eq.s32.totalorder %s19, 1
    %p194 = por %p192, %p193
    %p195 = scmp.ne.s32.totalorder %s184, %s185
    %p196 = scmp.eq.s32.totalorder %s19, 0
    %p197 = por %p195, %p196
    %p198 = scmp.ne.s32.totalorder %s184, %s185
    %p199 = scmp.eq.s32.totalorder %s20, 1
    %p200 = por %p198, %p199
    %p202 = scmp.ne.s32.totalorder %s185, %s201
    %p203 = scmp.eq.s32.totalorder %s20, 0
    %p204 = por %p202, %p203
    %s205 = ssub.s32 %s21, %s33
    %p206 = scmp.eq.s32.totalorder %s205, 0
    %s208 = sadd.s32 %s207, 1
    %s209 = scalar_select %p206, %s207, %s208
    %p212 = pneg %p206
    %p213 = scmp.eq.s32.totalorder %s14, 1
    %p214 = por %p212, %p213
    %p215 = scmp.ne.s32.totalorder %s207, %s210
    %p216 = scmp.eq.s32.totalorder %s14, 0
    %p217 = por %p215, %p216
    %p218 = scmp.ne.s32.totalorder %s207, %s210
    %p219 = scmp.eq.s32.totalorder %s19, 1
    %p220 = por %p218, %p219
    %p221 = scmp.ne.s32.totalorder %s210, %s211
    %p222 = scmp.eq.s32.totalorder %s19, 0
    %p223 = por %p221, %p222
    %p224 = scmp.ne.s32.totalorder %s210, %s211
    %p225 = scmp.eq.s32.totalorder %s20, 1
    %p226 = por %p224, %p225
    %p228 = scmp.ne.s32.totalorder %s211, %s227
    %p229 = scmp.eq.s32.totalorder %s20, 0
    %p230 = por %p228, %p229
    %p231 = scmp.le.s32.totalorder 1, %s14
    %p232 = scmp.lt.s32.totalorder %s14, 3
    %p233 = pnand %p231, %p232
    %p234 = pneg %p233
    // Predicated region
    $region9: #{siamese_forward.3} parent=5 // pred_check
      _
    $region10: #{siamese_forward.3} parent=5 // pred_check_branch
      %236 = sbr.rel (%p233) target = $region12
    $region11: #{siamese_forward.3} parent=5 // pred_region
      %s237 = ssub.s32 %s14, 1
      // Predicated region
      $region13: #{siamese_forward.3} parent=11 // pred_check
        %p238 = pneg %p129
      $region14: #{siamese_forward.3} parent=11 // pred_check_branch
        %240 = sbr.rel (%p238) target = $region16
      $region15: #{siamese_forward.3} parent=11 // pred_region
        _
      $region16: #{siamese_forward.3} parent=11 // pred_fallthru
        _
      // Predicated region
      $region17: #{siamese_forward.3} parent=11 // pred_check
        %p241 = pneg %p150
      $region18: #{siamese_forward.3} parent=11 // pred_check_branch
        %243 = sbr.rel (%p241) target = $region20
      $region19: #{siamese_forward.3} parent=11 // pred_region
        _
      $region20: #{siamese_forward.3} parent=11 // pred_fallthru
        _
      // Predicated region
      $region21: #{siamese_forward.3} parent=11 // pred_check
        %p244 = pneg %p171
      $region22: #{siamese_forward.3} parent=11 // pred_check_branch
        %246 = sbr.rel (%p244) target = $region24
      $region23: #{siamese_forward.3} parent=11 // pred_region
        _
      $region24: #{siamese_forward.3} parent=11 // pred_fallthru
        _
    $region12: #{siamese_forward.3} parent=5 // pred_fallthru
      _
    %p247 = scmp.lt.s32.totalorder %s14, 2
    // Predicated region
    $region25: #{siamese_forward.3} parent=5 // pred_check
      %p248 = pneg %p247
    $region26: #{siamese_forward.3} parent=5 // pred_check_branch
      %250 = sbr.rel (%p248) target = $region28
    $region27: #{siamese_forward.3} parent=5 // pred_region
      // Predicated region
      $region29: #{siamese_forward.3} parent=27 // pred_check
        %p251 = pneg %p48
      $region30: #{siamese_forward.3} parent=27 // pred_check_branch
        %253 = sbr.rel (%p251) target = $region32
      $region31: #{siamese_forward.3} parent=27 // pred_region
        %s254 = smul.u32 2, %s22
        %p255 = scmp.lt.s32.totalorder %s21, 0
        %s256 = scalar_select %p255, %s21, 0
        %p257 = scmp.lt.s32.totalorder %s254, 3
        %s258 = scalar_select %p257, %s254, 3
        %s259 = smul.addr %s256, 4
        %s260 = sadd.s32 %s258, %s259
        %s261 = smul.addr %s260, 4
        %s262 = scalar_lea.vmem %s0, %s261
        %s263 = smul.u32 2, %s22
      $region32: #{siamese_forward.3} parent=27 // pred_fallthru
        _
      // Predicated region
      $region33: #{siamese_forward.3} parent=27 // pred_check
        %p264 = pneg %p76
      $region34: #{siamese_forward.3} parent=27 // pred_check_branch
        %266 = sbr.rel (%p264) target = $region36
      $region35: #{siamese_forward.3} parent=27 // pred_region
        %s267 = smul.u32 2, %s22
        %p268 = scmp.lt.s32.totalorder %s21, 0
        %s269 = scalar_select %p268, %s21, 0
        %p270 = scmp.lt.s32.totalorder %s267, 3
        %s271 = scalar_select %p270, %s267, 3
        %s272 = smul.addr %s269, 4
        %s273 = sadd.s32 %s271, %s272
        %s274 = smul.addr %s273, 4
        %s275 = scalar_lea.vmem %s1, %s274
        %s276 = smul.u32 2, %s22
      $region36: #{siamese_forward.3} parent=27 // pred_fallthru
        _
      // Predicated region
      $region37: #{siamese_forward.3} parent=27 // pred_check
        %p277 = pneg %p102
      $region38: #{siamese_forward.3} parent=27 // pred_check_branch
        %279 = sbr.rel (%p277) target = $region40
      $region39: #{siamese_forward.3} parent=27 // pred_region
        %s280 = smul.u32 32, %s22
        %p281 = scmp.lt.s32.totalorder %s280, 63
        %s282 = scalar_select %p281, %s280, 63
        %s283 = smul.addr %s282, 4
        %s284 = scalar_lea.vmem %s2, %s283
        %s285 = smul.u32 32, %s22
      $region40: #{siamese_forward.3} parent=27 // pred_fallthru
        _
    $region28: #{siamese_forward.3} parent=5 // pred_fallthru
      _
    %p286 = scmp.le.s32.totalorder 1, %s14
    %p287 = scmp.lt.s32.totalorder %s14, 3
    %p288 = pnand %p286, %p287
    %p289 = pneg %p288
    // Predicated region
    $region41: #{siamese_forward.3} parent=5 // pred_check
      _
    $region42: #{siamese_forward.3} parent=5 // pred_check_branch
      %291 = sbr.rel (%p288) target = $region44
    $region43: #{siamese_forward.3} parent=5 // pred_region
      %s292 = ssub.s32 %s14, 1
      %s293 = smul.u32 2, %s24
      %p294 = scmp.lt.s32.totalorder %s23, 0
      %s295 = scalar_select %p294, %s23, 0
      %p296 = scmp.lt.s32.totalorder %s293, 3
      %s297 = scalar_select %p296, %s293, 3
      %s298 = smul.addr %s295, 4
      %s299 = sadd.s32 %s297, %s298
      %s300 = smul.addr %s299, 4
      %s301 = scalar_lea.vmem %s0, %s300
      %p302 = pneg %p54
      %p303 = pneg %p51
      %s304 = smul.u32 2, %s24
      %p305 = scmp.lt.s32.totalorder %s23, 0
      %s306 = scalar_select %p305, %s23, 0
      %p307 = scmp.lt.s32.totalorder %s304, 3
      %s308 = scalar_select %p307, %s304, 3
      %s309 = smul.addr %s306, 4
      %s310 = sadd.s32 %s308, %s309
      %s311 = smul.addr %s310, 4
      %s312 = scalar_lea.vmem %s1, %s311
      %p313 = pneg %p82
      %p314 = pneg %p79
      %s315 = smul.u32 32, %s24
      %p316 = scmp.lt.s32.totalorder %s315, 63
      %s317 = scalar_select %p316, %s315, 63
      %s318 = smul.addr %s317, 4
      %s319 = scalar_lea.vmem %s2, %s318
      %p320 = pneg %p108
      %p321 = pneg %p105
      %p322 = pneg %p129
      %p323 = pneg %p126
      %p324 = pneg %p150
      %p325 = pneg %p147
      %p326 = pneg %p171
      %p327 = pneg %p168
      %p328 = pneg %p197
      %p329 = pneg %p194
      %p330 = scmp.lt.s32.totalorder %s23, 0
      %s331 = scalar_select %p330, %s23, 0
      %s332 = smul.addr %s331, 8
      %s333 = scalar_lea.vmem %s6, %s332
      %p334 = pneg %p223
      %p335 = pneg %p220
      %p336 = scmp.lt.s32.totalorder %s23, 0
      %s337 = scalar_select %p336, %s23, 0
      %s338 = smul.addr %s337, 8
      %s339 = scalar_lea.vmem %s7, %s338
      %s340 = smul.u32 2, %s24
      %p341 = scmp.lt.s32.totalorder %s23, 0
      %s342 = scalar_select %p341, %s23, 0
      %p343 = scmp.lt.s32.totalorder %s340, 3
      %s344 = scalar_select %p343, %s340, 3
      %s345 = smul.addr %s342, 4
      %s346 = sadd.s32 %s344, %s345
      %s347 = smul.addr %s346, 4
      %s348 = scalar_lea.vmem %s0, %s347
      %s349 = smul.u32 2, %s24
      %s350 = smul.u32 2, %s24
      %p351 = scmp.lt.s32.totalorder %s23, 0
      %s352 = scalar_select %p351, %s23, 0
      %p353 = scmp.lt.s32.totalorder %s350, 3
      %s354 = scalar_select %p353, %s350, 3
      %s355 = smul.addr %s352, 4
      %s356 = sadd.s32 %s354, %s355
      %s357 = smul.addr %s356, 4
      %s358 = scalar_lea.vmem %s1, %s357
      %s359 = smul.u32 2, %s24
      %s360 = smul.u32 32, %s24
      %p361 = scmp.lt.s32.totalorder %s360, 63
      %s362 = scalar_select %p361, %s360, 63
      %s363 = smul.addr %s362, 4
      %s364 = scalar_lea.vmem %s2, %s363
      %s365 = smul.u32 32, %s24
      %p366 = scmp.lt.s32.totalorder %s23, 0
      %s367 = scalar_select %p366, %s23, 0
      %s368 = smul.addr %s367, 8
      %s369 = scalar_lea.vmem %s6, %s368
      %p370 = scmp.lt.s32.totalorder %s23, 0
      %s371 = scalar_select %p370, %s23, 0
      %s372 = smul.addr %s371, 8
      %s373 = scalar_lea.vmem %s7, %s372
      %p374 = scmp.eq.s32.totalorder %s24, 0
      // Predicated region
      $region45: #{siamese_forward.3} parent=43 // pred_check
        %p375 = pneg %p374
      $region46: #{siamese_forward.3} parent=43 // pred_check_branch
        %377 = sbr.rel (%p375) target = $region48
      $region47: #{siamese_forward.3} parent=43 // pred_region
        %378 = vst [vmem:[#allocation2] sm:$0xff] 0.0
      $region48: #{siamese_forward.3} parent=43 // pred_fallthru
        _
      %v379 = vld [vmem:[%s348] sm:$0xff]
      %v380 = vld [vmem:[%s358] sm:$0xff]
      %v381 = vunpack.c.l.bf16 %v379
      %v382 = vunpack.c.h.bf16 %v379
      %v383 = vunpack.c.l.bf16 %v380
      %v384 = vunpack.c.h.bf16 %v380
      %v385 = vsub.f32 %v381, %v383
      %v386 = vsub.f32 %v382, %v384
      %v387 = vpack.c.bf16 %v385, %v385
      %v388 = vpack.c.bf16 %v386, %v386
      %v389 = vand.u32 2147450879, %v387
      %v390 = vand.u32 2147450879, %v388
      %v391 = vld [vmem:[#allocation2] sm:$0xff]
      %v392 = vld [vmem:[%s364] sm:$0xf]
      %v393 = vld [vmem:[%s364 + $0x4] sm:$0xf]
      %v394 = vld [vmem:[%s364 + $0x8] sm:$0xf]
      %v395 = vld [vmem:[%s364 + $0xc] sm:$0xf]
      %v396 = vld [vmem:[%s364 + $0x10] sm:$0xf]
      %v397 = vld [vmem:[%s364 + $0x14] sm:$0xf]
      %v398 = vld [vmem:[%s364 + $0x18] sm:$0xf]
      %v399 = vld [vmem:[%s364 + $0x1c] sm:$0xf]
      %v400 = vld [vmem:[%s364 + $0x20] sm:$0xf]
      %v401 = vld [vmem:[%s364 + $0x24] sm:$0xf]
      %v402 = vld [vmem:[%s364 + $0x28] sm:$0xf]
      %v403 = vld [vmem:[%s364 + $0x2c] sm:$0xf]
      %v404 = vld [vmem:[%s364 + $0x30] sm:$0xf]
      %v405 = vld [vmem:[%s364 + $0x34] sm:$0xf]
      %v406 = vld [vmem:[%s364 + $0x38] sm:$0xf]
      %v407 = vld [vmem:[%s364 + $0x3c] sm:$0xf]
      %v408 = vld [vmem:[%s364 + $0x40] sm:$0xf]
      %v409 = vld [vmem:[%s364 + $0x44] sm:$0xf]
      %v410 = vld [vmem:[%s364 + $0x48] sm:$0xf]
      %v411 = vld [vmem:[%s364 + $0x4c] sm:$0xf]
      %v412 = vld [vmem:[%s364 + $0x50] sm:$0xf]
      %v413 = vld [vmem:[%s364 + $0x54] sm:$0xf]
      %v414 = vld [vmem:[%s364 + $0x58] sm:$0xf]
      %v415 = vld [vmem:[%s364 + $0x5c] sm:$0xf]
      %v416 = vld [vmem:[%s364 + $0x60] sm:$0xf]
      %v417 = vld [vmem:[%s364 + $0x64] sm:$0xf]
      %v418 = vld [vmem:[%s364 + $0x68] sm:$0xf]
      %v419 = vld [vmem:[%s364 + $0x6c] sm:$0xf]
      %v420 = vld [vmem:[%s364 + $0x70] sm:$0xf]
      %v421 = vld [vmem:[%s364 + $0x74] sm:$0xf]
      %v422 = vld [vmem:[%s364 + $0x78] sm:$0xf]
      %v423 = vld [vmem:[%s364 + $0x7c] sm:$0xf]
      %v456 = vunpack.c.l.b16 %v392
      %v457 = vunpack.c.l.b16 %v393
      %v458 = vunpack.c.l.b16 %v394
      %v459 = vunpack.c.l.b16 %v395
      %v460 = vunpack.c.l.b16 %v396
      %v461 = vunpack.c.l.b16 %v397
      %v462 = vunpack.c.l.b16 %v398
      %v463 = vunpack.c.l.b16 %v399
      %v464 = vunpack.c.l.b16 %v400
      %v465 = vunpack.c.l.b16 %v401
      %v466 = vunpack.c.l.b16 %v402
      %v467 = vunpack.c.l.b16 %v403
      %v468 = vunpack.c.l.b16 %v404
      %v469 = vunpack.c.l.b16 %v405
      %v470 = vunpack.c.l.b16 %v406
      %v471 = vunpack.c.l.b16 %v407
      %v472 = vunpack.c.l.b16 %v408
      %v473 = vunpack.c.l.b16 %v409
      %v474 = vunpack.c.l.b16 %v410
      %v475 = vunpack.c.l.b16 %v411
      %v476 = vunpack.c.l.b16 %v412
      %v477 = vunpack.c.l.b16 %v413
      %v478 = vunpack.c.l.b16 %v414
      %v479 = vunpack.c.l.b16 %v415
      %v480 = vunpack.c.l.b16 %v416
      %v481 = vunpack.c.l.b16 %v417
      %v482 = vunpack.c.l.b16 %v418
      %v483 = vunpack.c.l.b16 %v419
      %v484 = vunpack.c.l.b16 %v420
      %v485 = vunpack.c.l.b16 %v421
      %v486 = vunpack.c.l.b16 %v422
      %v487 = vunpack.c.l.b16 %v423
      %v488 = vpack.c.b16 %v457, %v456
      %v489 = vpack.c.b16 %v459, %v458
      %v490 = vpack.c.b16 %v461, %v460
      %v491 = vpack.c.b16 %v463, %v462
      %v492 = vpack.c.b16 %v465, %v464
      %v493 = vpack.c.b16 %v467, %v466
      %v494 = vpack.c.b16 %v469, %v468
      %v495 = vpack.c.b16 %v471, %v470
      %v496 = vpack.c.b16 %v473, %v472
      %v497 = vpack.c.b16 %v475, %v474
      %v498 = vpack.c.b16 %v477, %v476
      %v499 = vpack.c.b16 %v479, %v478
      %v500 = vpack.c.b16 %v481, %v480
      %v501 = vpack.c.b16 %v483, %v482
      %v502 = vpack.c.b16 %v485, %v484
      %v503 = vpack.c.b16 %v487, %v486
      %520 = vmatpush.bf16.msra.mxu0 %v495
      %521 = vmatpush.bf16.msra.mxu0 %v494
      %522 = vmatpush.bf16.msra.mxu0 %v493
      %523 = vmatpush.bf16.msra.mxu0 %v492
      %524 = vmatpush.bf16.msra.mxu0 %v491
      %525 = vmatpush.bf16.msra.mxu0 %v490
      %526 = vmatpush.bf16.msra.mxu0 %v489
      %527 = vmatpush.bf16.msra.mxu0 %v488
      %528 = vmatmul.bf16.gmra.mxu0 %v389
      %v529 = vpop.f32.mrf.mxu0
      %v530 = vadd.f32 0.0, %v529
      %v531 = vpop.f32.mrf.mxu0
      %532 = vdwg.mxu0
      %533 = vmatpush.bf16.msra.mxu0 %v503
      %534 = vmatpush.bf16.msra.mxu0 %v502
      %535 = vmatpush.bf16.msra.mxu0 %v501
      %536 = vmatpush.bf16.msra.mxu0 %v500
      %537 = vmatpush.bf16.msra.mxu0 %v499
      %538 = vmatpush.bf16.msra.mxu0 %v498
      %539 = vmatpush.bf16.msra.mxu0 %v497
      %540 = vmatpush.bf16.msra.mxu0 %v496
      %541 = vmatmul.bf16.gmra.mxu0 %v390
      %v542 = vpop.f32.mrf.mxu0
      %v543 = vadd.f32 %v530, %v542
      %v544 = vpop.f32.mrf.mxu0
      %545 = vdwg.mxu0
      %v546 = vadd.f32 %v391, %v543
      %547 = vst [vmem:[#allocation2] sm:$0xff] %v546
      %p548 = scmp.eq.s32.totalorder %s24, 1
      // Predicated region
      $region49: #{siamese_forward.3} parent=43 // pred_check
        %p549 = pneg %p548
      $region50: #{siamese_forward.3} parent=43 // pred_check_branch
        %551 = sbr.rel (%p549) target = $region52
      $region51: #{siamese_forward.3} parent=43 // pred_region
        %v552 = vld [vmem:[#allocation2] sm:$0xff]
        %v553 = vld [vmem:[%s3] sm:$0x1]
        %v555 = vperm.slane %v553, 0
        %v557 = vadd.f32 %v552, %v555
        %v558 = vmul.f32 %v557, %v557
        %559 = vadd.xlane.f32.xlu0 %v558
        %v560 = vpop.xlane.xlu0 %559
        %v561 = vrsqrt.pop %v560
        %v562 = vmul.f32 %v561, %v560
        %v563 = vmul.f32 %v562, %v561
        %v564 = vmul.f32 0.5, %v563
        %v565 = vsub.f32 1.5, %v564
        %v566 = vmul.f32 %v561, %v565
        %v567 = vmul.f32 %v560, %v566
        %vm568 = vcmp.eq.f32.partialorder %v560, inf
        %v569 = vsel %vm568, %v560, %v567
        %vm570 = vcmp.eq.f32.partialorder %v560, 0.0
        %v571 = vand.u32 %v560, 2147483648
        %v572 = vsel %vm570, %v571, %v569
        %v573 = vadd.f32 %v572, 1e-05
        %v574 = vrcp.pop %v573
        %v575 = vmin.f32 %v574, 1.0
        %v576 = vmul.f32 %v557, %v575
        %v577 = vmul.f32 %v576, %v576
        %578 = vadd.xlane.f32.xlu0 %v577
        %v579 = vpop.xlane.xlu0 %578
        %v580 = vrsqrt.pop %v579
        %v581 = vmul.f32 %v580, %v579
        %v582 = vmul.f32 %v581, %v580
        %v583 = vmul.f32 0.5, %v582
        %v584 = vsub.f32 1.5, %v583
        %v585 = vmul.f32 %v580, %v584
        %v586 = vmul.f32 %v579, %v585
        %vm587 = vcmp.eq.f32.partialorder %v579, inf
        %v588 = vsel %vm587, %v579, %v586
        %vm589 = vcmp.eq.f32.partialorder %v579, 0.0
        %v590 = vand.u32 %v579, 2147483648
        %v591 = vsel %vm589, %v590, %v588
        %v592 = vmax.f32 %v591, 1e-15
        %v593 = vmul.f32 %v592, 0.31622776
        %v594 = vtanh.pop %v593
        %v595 = vmul.f32 %v594, %v576
        %v596 = vrcp.pop %v593
        %v597 = vmul.f32 %v595, %v596
        %v598 = vmul.f32 %v597, %v597
        %599 = vadd.xlane.f32.xlu0 %v598
        %v600 = vpop.xlane.xlu0 %599
        %v601 = vrsqrt.pop %v600
        %v602 = vmul.f32 %v601, %v600
        %v603 = vmul.f32 %v602, %v601
        %v604 = vmul.f32 0.5, %v603
        %v605 = vsub.f32 1.5, %v604
        %v606 = vmul.f32 %v601, %v605
        %v607 = vmul.f32 %v600, %v606
        %vm608 = vcmp.eq.f32.partialorder %v600, inf
        %v609 = vsel %vm608, %v600, %v607
        %vm610 = vcmp.eq.f32.partialorder %v600, 0.0
        %v611 = vand.u32 %v600, 2147483648
        %v612 = vsel %vm610, %v611, %v609
        %v613 = vmax.f32 %v612, 1e-15
        %vm614 = vcmp.gt.f32.partialorder %v613, 3.1496286
        %v615 = vrcp.pop %v613
        %v616 = vmul.f32 %v615, 3.1496286
        %v617 = vmul.f32 %v597, %v616
        %v618 = vsel %vm614, 1, 0
        %vm619 = vcmp.eq.s32.totalorder %v618, 1
        %v620 = vsel %vm619, %v617, %v597
        %621 = vst [vmem:[%s369] sm:$0xff] %v620
        %v622 = vld [vmem:[%s5] sm:$0x3]
        %v623 = vld [vmem:[%s4] sm:$0x3]
        %v624 = vmul.f32 %v622, %v622
        %vm625 = vcmask 1041408
        %v626 = vsel %vm625, %v624, 0.0
        %627 = vadd.xlane.f32.xlu0 %v626
        %v628 = vpop.xlane.xlu0 %627
        %v629 = vrsqrt.pop %v628
        %v630 = vmul.f32 %v629, %v628
        %v631 = vmul.f32 %v630, %v629
        %v632 = vmul.f32 0.5, %v631
        %v633 = vsub.f32 1.5, %v632
        %v634 = vmul.f32 %v629, %v633
        %v635 = vmul.f32 %v628, %v634
        %vm636 = vcmp.eq.f32.partialorder %v628, inf
        %v637 = vsel %vm636, %v628, %v635
        %vm638 = vcmp.eq.f32.partialorder %v628, 0.0
        %v639 = vand.u32 %v628, 2147483648
        %v640 = vsel %vm638, %v639, %v637
        %v641 = vmax.f32 %v640, 1e-15
        %v642 = vmul.f32 %v641, 0.31622776
        %v643 = vtanh.pop %v642
        %v644 = vmul.f32 %v643, %v622
        %v645 = vrcp.pop %v642
        %v646 = vmul.f32 %v644, %v645
        %v647 = vmul.f32 %v646, %v646
        %v648 = vsel %vm625, %v647, 0.0
        %649 = vadd.xlane.f32.xlu0 %v648
        %v650 = vpop.xlane.xlu0 %649
        %v651 = vmul.f32 %v650, 0.1
        %v652 = vsub.f32 1.0, %v651
        %v653 = vmul.f32 %v623, %v652
        %v654 = vmul.f32 %v653, %v653
        %v655 = vsel %vm625, %v654, 0.0
        %656 = vadd.xlane.f32.xlu0 %v655
        %v657 = vpop.xlane.xlu0 %656
        %v658 = vrsqrt.pop %v657
        %v659 = vmul.f32 %v658, %v657
        %v660 = vmul.f32 %v659, %v658
        %v661 = vmul.f32 0.5, %v660
        %v662 = vsub.f32 1.5, %v661
        %v663 = vmul.f32 %v658, %v662
        %v664 = vmul.f32 %v657, %v663
        %vm665 = vcmp.eq.f32.partialorder %v657, inf
        %v666 = vsel %vm665, %v657, %v664
        %vm667 = vcmp.eq.f32.partialorder %v657, 0.0
        %v668 = vand.u32 %v657, 2147483648
        %v669 = vsel %vm667, %v668, %v666
        %v670 = vmax.f32 %v669, 1e-15
        %v671 = vrcp.pop %v652
        %v672 = vmul.f32 %v671, 2.0
        %v673 = vmul.f32 %v672, %v670
        %v674 = vrcp.pop 0.31622776
        %v675 = vmul.f32 0.31622776, %v674
        %v676 = vsub.f32 1.0, %v675
        %v677 = vmul.f32 %v674, %v676
        %v678 = vadd.f32 %v674, %v677
        %vm679 = vweird.f32 %v674
        %v680 = vsel %vm679, %v674, %v678
        %v681 = vmul.f32 %v673, %v680
        %v682 = vmul.f32 %v620, %v620
        %683 = vadd.xlane.f32.xlu0 %v682
        %v684 = vpop.xlane.xlu0 %683
        %v685 = vsub.f32 0.0, %v646
        %v686 = vperm.slane %v685, 0
        %v687 = vmul.f32 %v686, %v620
        %688 = vadd.xlane.f32.xlu0 %v687
        %v689 = vpop.xlane.xlu0 %688
        %v690 = vmul.f32 %v689, 0.2
        %v691 = vadd.f32 %v690, 1.0
        %v692 = vmul.f32 %v684, 0.1
        %v693 = vadd.f32 %v691, %v692
        %v694 = vmul.f32 %v693, %v686
        %v695 = vperm.slane %v652, 0
        %v696 = vmul.f32 %v695, %v620
        %v697 = vadd.f32 %v694, %v696
        %v698 = vmul.f32 %v650, 0.01
        %v699 = vperm.slane %v698, 0
        %v700 = vmul.f32 %v699, %v684
        %v701 = vadd.f32 %v691, %v700
        %v702 = vadd.f32 %v701, 1e-05
        %v703 = vrcp.pop %v702
        %v704 = vmul.f32 %v697, %v703
        %v705 = vperm.slane %v653, 0
        %v706 = vmul.f32 %v704, %v705
        %707 = vadd.xlane.f32.xlu0 %v706
        %v708 = vpop.xlane.xlu0 %707
        %v709 = vmul.f32 %v708, 0.6324555
        %v710 = vmul.f32 %v704, %v704
        %711 = vadd.xlane.f32.xlu0 %v710
        %v712 = vpop.xlane.xlu0 %711
        %v713 = vmul.f32 %v712, 0.1
        %v714 = vsub.f32 1.0, %v713
        %v715 = vperm.slane %v670, 0
        %v716 = vmul.f32 %v715, %v714
        %v717 = vand.u32 2147483647, %v716
        %vm718 = vcmp.lt.f32.partialorder %v717, 1e-10
        %v719 = vsel %vm718, 1e-10, %v716
        %v720 = vrcp.pop %v719
        %v721 = vmul.f32 %v709, %v720
        %v722 = vand.u32 2147483647, %v721
        %vm723 = vcmp.ge.f32.partialorder %v721, 0.0
        %v724 = vsel %vm723, 1.0, -1.0
        %v725 = vmul.f32 %v722, %v722
        %v726 = vadd.f32 %v725, 1.0
        %v727 = vrsqrt.pop %v726
        %v728 = vmul.f32 %v727, %v726
        %v729 = vmul.f32 %v728, %v727
        %v730 = vmul.f32 0.5, %v729
        %v731 = vsub.f32 1.5, %v730
        %v732 = vmul.f32 %v727, %v731
        %v733 = vmul.f32 %v726, %v732
        %vm734 = vcmp.eq.f32.partialorder %v726, inf
        %v735 = vsel %vm734, %v726, %v733
        %vm736 = vcmp.eq.f32.partialorder %v726, 0.0
        %v737 = vand.u32 %v726, 2147483648
        %v738 = vsel %vm736, %v737, %v735
        %v739 = vadd.f32 %v722, %v738
        %v740 = vlog2.pop %v739
        %v741 = vmul.f32 %v740, 0.6931472
        %v742 = vmul.f32 %v724, %v741
        %v743 = vperm.slane %v681, 0
        %v744 = vmul.f32 %v743, %v742
        %v745 = vperm.slane %v685, 1
        %v746 = vmul.f32 %v745, %v620
        %747 = vadd.xlane.f32.xlu0 %v746
        %v748 = vpop.xlane.xlu0 %747
        %v749 = vmul.f32 %v748, 0.2
        %v750 = vadd.f32 %v749, 1.0
        %v751 = vadd.f32 %v750, %v692
        %v752 = vmul.f32 %v751, %v745
        %v753 = vperm.slane %v652, 1
        %v754 = vmul.f32 %v753, %v620
        %v755 = vadd.f32 %v752, %v754
        %v756 = vperm.slane %v698, 1
        %v757 = vmul.f32 %v756, %v684
        %v758 = vadd.f32 %v750, %v757
        %v759 = vadd.f32 %v758, 1e-05
        %v760 = vrcp.pop %v759
        %v761 = vmul.f32 %v755, %v760
        %v762 = vperm.slane %v653, 1
        %v763 = vmul.f32 %v761, %v762
        %764 = vadd.xlane.f32.xlu0 %v763
        %v765 = vpop.xlane.xlu0 %764
        %v766 = vmul.f32 %v765, 0.6324555
        %v767 = vmul.f32 %v761, %v761
        %768 = vadd.xlane.f32.xlu0 %v767
        %v769 = vpop.xlane.xlu0 %768
        %v770 = vmul.f32 %v769, 0.1
        %v771 = vsub.f32 1.0, %v770
        %v772 = vperm.slane %v670, 1
        %v773 = vmul.f32 %v772, %v771
        %v774 = vand.u32 2147483647, %v773
        %vm775 = vcmp.lt.f32.partialorder %v774, 1e-10
        %v776 = vsel %vm775, 1e-10, %v773
        %v777 = vrcp.pop %v776
        %v778 = vmul.f32 %v766, %v777
        %v779 = vand.u32 2147483647, %v778
        %vm780 = vcmp.ge.f32.partialorder %v778, 0.0
        %v781 = vsel %vm780, 1.0, -1.0
        %v782 = vmul.f32 %v779, %v779
        %v783 = vadd.f32 %v782, 1.0
        %v784 = vrsqrt.pop %v783
        %v785 = vmul.f32 %v784, %v783
        %v786 = vmul.f32 %v785, %v784
        %v787 = vmul.f32 0.5, %v786
        %v788 = vsub.f32 1.5, %v787
        %v789 = vmul.f32 %v784, %v788
        %v790 = vmul.f32 %v783, %v789
        %vm791 = vcmp.eq.f32.partialorder %v783, inf
        %v792 = vsel %vm791, %v783, %v790
        %vm793 = vcmp.eq.f32.partialorder %v783, 0.0
        %v794 = vand.u32 %v783, 2147483648
        %v795 = vsel %vm793, %v794, %v792
        %v796 = vadd.f32 %v779, %v795
        %v797 = vlog2.pop %v796
        %v798 = vmul.f32 %v797, 0.6931472
        %v799 = vmul.f32 %v781, %v798
        %v800 = vperm.slane %v681, 1
        %v801 = vmul.f32 %v800, %v799
        %v802 = vmax.f32 %v744, %v801
        %v803 = vsub.f32 %v744, %v802
        %v804 = vmul.f32 %v803, 1.442695
        %v805 = vpow.pop %v804
        %v806 = vadd.f32 %v805, 0.0
        %v807 = vsub.f32 %v801, %v802
        %v808 = vmul.f32 %v807, 1.442695
        %v809 = vpow.pop %v808
        %v810 = vadd.f32 %v806, %v809
        %v811 = vlog2.pop %v810
        %v812 = vmul.f32 %v811, 0.6931472
        %v813 = vadd.f32 %v802, %v812
        %v814 = vlaneseq
        %v815 = vand.u32 %v814, 127
        %vm816 = vcmp.eq.s32.totalorder %v815, 0
        %v817 = vsub.f32 %v744, %v813
        %v818 = vsel %vm816, %v817, 0.0
        %vm819 = vcmp.eq.s32.totalorder %v815, 1
        %v820 = vsub.f32 %v801, %v813
        %v821 = vsel %vm819, %v820, %v818
        %822 = vst [vmem:[%s373] sm:$0xff] %v821
      $region52: #{siamese_forward.3} parent=43 // pred_fallthru
        _
      %p823 = scmp.lt.s32.totalorder %s23, 0
      %s824 = scalar_select %p823, %s23, 0
      %s825 = smul.addr %s824, 8
      %s826 = scalar_lea.vmem %s6, %s825
      %p827 = scmp.lt.s32.totalorder %s23, 0
      %s828 = scalar_select %p827, %s23, 0
      %s829 = smul.addr %s828, 8
      %s830 = scalar_lea.vmem %s7, %s829
      // Predicated region
      $region53: #{siamese_forward.3} parent=43 // pred_check
        %p831 = pneg %p194
      $region54: #{siamese_forward.3} parent=43 // pred_check_branch
        %833 = sbr.rel (%p831) target = $region56
      $region55: #{siamese_forward.3} parent=43 // pred_region
        _
      $region56: #{siamese_forward.3} parent=43 // pred_fallthru
        _
      // Predicated region
      $region57: #{siamese_forward.3} parent=43 // pred_check
        %p834 = pneg %p220
      $region58: #{siamese_forward.3} parent=43 // pred_check_branch
        %836 = sbr.rel (%p834) target = $region60
      $region59: #{siamese_forward.3} parent=43 // pred_region
        _
      $region60: #{siamese_forward.3} parent=43 // pred_fallthru
        _
      // Predicated region
      $region61: #{siamese_forward.3} parent=43 // pred_check
        %p837 = pneg %p194
      $region62: #{siamese_forward.3} parent=43 // pred_check_branch
        %839 = sbr.rel (%p837) target = $region64
      $region63: #{siamese_forward.3} parent=43 // pred_region
        %p840 = scmp.lt.s32.totalorder %s23, 0
        %s841 = scalar_select %p840, %s23, 0
        %s842 = smul.addr %s841, 8
        %s843 = scalar_lea.vmem %s6, %s842
      $region64: #{siamese_forward.3} parent=43 // pred_fallthru
        _
      // Predicated region
      $region65: #{siamese_forward.3} parent=43 // pred_check
        %p844 = pneg %p220
      $region66: #{siamese_forward.3} parent=43 // pred_check_branch
        %846 = sbr.rel (%p844) target = $region68
      $region67: #{siamese_forward.3} parent=43 // pred_region
        %p847 = scmp.lt.s32.totalorder %s23, 0
        %s848 = scalar_select %p847, %s23, 0
        %s849 = smul.addr %s848, 8
        %s850 = scalar_lea.vmem %s7, %s849
      $region68: #{siamese_forward.3} parent=43 // pred_fallthru
        _
    $region44: #{siamese_forward.3} parent=5 // pred_fallthru
      _
    %p851 = scmp.le.s32.totalorder 2, %s14
    // Predicated region
    $region69: #{siamese_forward.3} parent=5 // pred_check
      %p852 = pneg %p851
    $region70: #{siamese_forward.3} parent=5 // pred_check_branch
      %854 = sbr.rel (%p852) target = $region72
    $region71: #{siamese_forward.3} parent=5 // pred_region
      %s855 = ssub.s32 %s14, 2
    $region72: #{siamese_forward.3} parent=5 // pred_fallthru
      _
  $region6: #{siamese_forward.3} parent=0 // loop_footer
    %s18 = sadd.s32 1, %s14
  $region7: #{siamese_forward.3} parent=0 // loop_footer_branch
    %13 = sbr.rel target = $region3
  $region8: #{siamese_forward.3} parent=0 // loop_exit
    _

</llo_original>
